<compile_context>
chip_gen: v5e
topology: v5e:2x2
jax: 0.10.0
libtpu: 0.0.40
codegen_flags: <defaults>
</compile_context>

<pallas_src>
import numpy as np
import jax
import jax.numpy as jnp
from jax import lax
from jax.experimental import pallas as pl
from jax.experimental.pallas import tpu as pltpu

K = 7      # conv kernel size
PAD = 3    # "same" padding


# ----------------------------------------------------------------------------
# Host-side constant construction (vectorized numpy; O(K*(H^2 + W^2)) bytes).
# ----------------------------------------------------------------------------
def _build_factored_weights(weight_np, C, H, W):
    """(1,2,K,K) conv weights -> factored conv operators.

    band[kh, ci, w_in, w_out] = weight[0, ci, kh, w_in - w_out + PAD]  (valid taps)
    shift[kh, h, r]           = 1  iff  r == h + (kh - PAD)            (0 <= r < H)

    so   conv(out)[h, :] = sum_kh shift[kh] @ ( sum_ci in_ci @ band[kh, ci] )
    which is exactly the zero-padded 7x7 cross-correlation.  The avg channel's
    weights are pre-scaled by 1/C so the kernel can feed the raw channel SUM.
    """
    w_in = np.arange(W)[:, None]
    w_out = np.arange(W)[None, :]
    kw = w_in - w_out + PAD                                  # (W, W) tap index
    valid = (kw >= 0) & (kw < K)
    kw_c = np.clip(kw, 0, K - 1)
    taps = weight_np[0][:, :, kw_c]                          # (2, K, W, W)
    band = np.where(valid[None, None], taps, 0.0).astype(np.float32)
    band = np.transpose(band, (1, 0, 2, 3)).copy()           # (K, 2, W, W)
    band[:, 0] *= 1.0 / float(C)                             # fold mean's 1/C
    shift = np.stack([np.eye(H, k=kh - PAD, dtype=np.float32) for kh in range(K)])
    return band, shift                                       # (K,2,W,W), (K,H,H)


# ----------------------------------------------------------------------------
# Generation-aware tiling helpers.
# ----------------------------------------------------------------------------
def _vmem_cap_bytes():
    try:
        info = pltpu.get_tpu_info()
        for name in ("vmem_capacity_bytes", "vmem_bytes", "vmem_capacity"):
            v = getattr(info, name, None)
            if isinstance(v, (int, np.integer)) and v > 0:
                return int(v)
    except Exception:
        pass
    return 64 * 1024 * 1024     # conservative default (v7x); v5e/v6e have 128 MiB


def _round_up(v, m):
    return -(-v // m) * m


def _plane_bytes(d0, d1, itemsize):
    """Padded VMEM footprint of one (d0, d1) tile (last-two-dims tiling rule)."""
    sub = 8 if itemsize >= 4 else (8 * 4) // itemsize        # 8 for f32, 16 for bf16
    return _round_up(d0, sub) * _round_up(d1, 128) * itemsize


def _pick_c_tile(C, per_channel_bytes, budget_bytes, cmult):
    """Largest divisor of C (== C, or a multiple of the dtype's sublane packing)
    whose single-buffer x block fits the per-buffer budget."""
    best = None
    for d in range(1, C + 1):
        if C % d:
            continue
        if d != C and d % cmult:
            continue
        if d * per_channel_bytes <= budget_bytes:
            best = d
    if best is None:
        # Nothing fits the budget: smallest legal tile.  The vmem limit below is
        # derived from the *actual* choice, so this still compiles.
        for d in range(1, C + 1):
            if C % d == 0 and (d == C or d % cmult == 0):
                return d
    return best


def _pick_n_tile(N, per_sample_bytes, budget_bytes):
    """Batch N into the block only when cheap; keep >= 2 N grid steps whenever
    N >= 2 so both v7x TensorCores get work via the 'parallel' axis."""
    best = 1
    for d in range(1, N + 1):
        if N % d or d > 8:
            continue
        if N >= 2 and N // d < 2:
            continue
        if d * per_sample_bytes <= budget_bytes:
            best = d
    return best


# ----------------------------------------------------------------------------
# Kernel.
# ----------------------------------------------------------------------------
def _make_kernel(H, W, n_tile, c_tile, c_chunk):
    n_chunks = c_tile // c_chunk

    def kernel(bias_ref, band_ref, shift_ref, x_ref, o_ref, sum_ref, max_ref):
        # bias_ref : SMEM (1,)                        conv bias
        # band_ref : VMEM (K, 2, W, W) bf16           column-banded weights
        # shift_ref: VMEM (K, H, H)    bf16           0/1 row-shift matrices
        # x_ref    : VMEM (n_tile, c_tile, H, W)      activations (bf16/f32)
        # o_ref    : VMEM (n_tile, H, W) f32          sigmoid attention maps
        # sum_ref / max_ref: VMEM (n_tile, H, W) f32  running channel sum / max
        k = pl.program_id(1)

        @pl.when(k == 0)
        def _init():
            sum_ref[...] = jnp.zeros_like(sum_ref)
            max_ref[...] = jnp.full_like(max_ref, -jnp.inf)

        # Channel reduction.  Channels sit on a *leading* (slab) axis, so the
        # reduce over axis=1 is pure element-wise VALU adds/maxes of (H, W)
        # slabs -- no cross-sublane XLU work in the steady state.  A chunked
        # fori_loop bounds the live working set for large c_tile blocks.
        if n_chunks == 1:
            v = x_ref[...].astype(jnp.float32)
            sum_ref[...] += jnp.sum(v, axis=1)
            max_ref[...] = jnp.maximum(max_ref[...], jnp.max(v, axis=1))
        else:
            def _accum(i, carry):
                off = pl.multiple_of(i * c_chunk, c_chunk)
                v = x_ref[:, pl.ds(off, c_chunk)].astype(jnp.float32)
                sum_ref[...] += jnp.sum(v, axis=1)
                max_ref[...] = jnp.maximum(max_ref[...], jnp.max(v, axis=1))
                return carry
            lax.fori_loop(0, n_chunks, _accum, 0)

        @pl.when(k == pl.num_programs(1) - 1)
        def _finalize():
            bias = bias_ref[0]
            for b in range(n_tile):                 # static unroll, n_tile small
                # 1/C is folded into the avg-channel band weights.
                s_b = sum_ref[b].astype(jnp.bfloat16)        # (H, W)
                m_b = max_ref[b].astype(jnp.bfloat16)        # (H, W)
                o_ref[b] = jnp.zeros((H, W), jnp.float32)
                for kh in range(K):
                    # column-banded matmuls (one per input channel), f32 acc
                    y = (jnp.dot(s_b, band_ref[kh, 0],
                                 preferred_element_type=jnp.float32)
                         + jnp.dot(m_b, band_ref[kh, 1],
                                   preferred_element_type=jnp.float32))
                    # row shift ("same" padding in H) as a 0/1 MXU matmul
                    o_ref[b] += jnp.dot(shift_ref[kh], y.astype(jnp.bfloat16),
                                        preferred_element_type=jnp.float32)
                o_ref[b] = jax.nn.sigmoid(o_ref[b] + bias)

    return kernel


# ----------------------------------------------------------------------------
# Wrapper.
# ----------------------------------------------------------------------------
def spatial_attention(x, weight, bias):
    """x: (N,C,H,W) bf16/f32; weight: (1,2,7,7); bias: (1,) -> (N,1,H,W) f32."""
    N, C, H, W = x.shape
    itemsize = jnp.dtype(x.dtype).itemsize

    band_np, shift_np = _build_factored_weights(
        np.asarray(weight, np.float32), C, H, W)
    band = jnp.asarray(band_np, dtype=jnp.bfloat16)      # (K, 2, W, W)
    shift = jnp.asarray(shift_np, dtype=jnp.bfloat16)    # (K, H, H)
    bias_arr = jnp.asarray(bias, jnp.float32).reshape(1)

    # --- generation-aware VMEM budgeting --------------------------------------
    vmem_cap = _vmem_cap_bytes()
    plane_x = _plane_bytes(H, W, itemsize)               # one (H, W) channel plane
    plane_f32 = _plane_bytes(H, W, 4)
    band_bytes = K * 2 * _plane_bytes(W, W, 2)
    shift_bytes = K * _plane_bytes(H, H, 2)
    # Resident besides the x blocks: weights (x2 buffers, constant index map),
    # output blocks, sum/max scratch, finalize temporaries (n_tile <= 8 bound).
    fixed = 2 * (band_bytes + shift_bytes) + 8 * 4 * plane_f32 + (4 << 20)
    x_budget_per_buf = max(1 << 20, int(0.6 * max(vmem_cap - fixed, 0)) // 2)

    # --- tiling: big C tiles (HBM-bound reduce); batch N only when cheap ------
    cmult = 8 if itemsize >= 4 else 16                   # bf16 packs 2 rows/sublane
    c_tile = _pick_c_tile(C, plane_x, x_budget_per_buf, cmult)
    n_tile = _pick_n_tile(N, c_tile * plane_x, x_budget_per_buf)
    # Inner-loop chunk bounds the live vreg working set of the channel reduce.
    c_chunk = 1
    for d in range(c_tile, 0, -1):
        if c_tile % d == 0 and n_tile * d * plane_f32 <= (2 << 20):
            c_chunk = d
            break
    grid = (N // n_tile, C // c_tile)

    # --- scoped-VMEM limit from the tiling actually chosen --------------------
    need = (2 * n_tile * c_tile * plane_x                # x block, double-buffered
            + 2 * n_tile * plane_f32                     # output block, x2 buffers
            + 2 * n_tile * plane_f32                     # sum / max accumulators
            + 2 * (band_bytes + shift_bytes)             # factored conv weights
            + 6 * plane_f32 + (2 << 20))                 # finalize temps + headroom
    vmem_limit = int(min(max(need, 16 << 20), max(vmem_cap - (2 << 20), need)))

    # --- advisory cost for XLA scheduling around the custom call --------------
    flops = int(N * (2 * C * H * W)                      # channel sum + max
                + N * K * (2 * 2 * H * W * W + 2 * H * H * W))   # band + shift mms
    bytes_accessed = int(N * C * H * W * itemsize + N * H * W * 4
                         + band.size * 2 + shift.size * 2 + 4)
    cost = pl.CostEstimate(flops=flops, transcendentals=int(N * H * W),
                           bytes_accessed=bytes_accessed)

    out = pl.pallas_call(
        _make_kernel(H, W, n_tile, c_tile, c_chunk),
        out_shape=jax.ShapeDtypeStruct((N, H, W), jnp.float32),
        grid_spec=pltpu.PrefetchScalarGridSpec(
            num_scalar_prefetch=0,
            grid=grid,
            in_specs=[
                pl.BlockSpec(memory_space=pltpu.SMEM),                        # bias
                pl.BlockSpec((K, 2, W, W), lambda n, k: (0, 0, 0, 0)),        # band
                pl.BlockSpec((K, H, H), lambda n, k: (0, 0, 0)),              # shift
                pl.BlockSpec((n_tile, c_tile, H, W), lambda n, k: (n, k, 0, 0)),
            ],
            out_specs=pl.BlockSpec((n_tile, H, W), lambda n, k: (n, 0, 0)),
            scratch_shapes=[
                pltpu.VMEM((n_tile, H, W), jnp.float32),   # running channel sum
                pltpu.VMEM((n_tile, H, W), jnp.float32),   # running channel max
            ],
        ),
        compiler_params=pltpu.CompilerParams(
            dimension_semantics=("parallel", "arbitrary"),
            vmem_limit_bytes=vmem_limit,
        ),
        cost_estimate=cost,
    )(bias_arr, band, shift, x)

    return out.reshape(N, 1, H, W)


# ----------------------------------------------------------------------------
# Pure-JAX reference.
# ----------------------------------------------------------------------------
def _reference(x, weight, bias):
    avg = jnp.mean(x, axis=1, keepdims=True)
    mx = jnp.max(x, axis=1, keepdims=True)
    cat = jnp.concatenate([avg, mx], axis=1)
    conv = lax.conv_general_dilated(
        cat, weight, window_strides=(1, 1),
        padding=[(PAD, PAD), (PAD, PAD)],
        dimension_numbers=("NCHW", "OIHW", "NCHW"),
        precision=lax.Precision.HIGHEST,
    )
    return jax.nn.sigmoid(conv + bias.reshape(1, 1, 1, 1))


if __name__ == "__main__":
    key = jax.random.PRNGKey(0)
    kx, kw, kb = jax.random.split(key, 3)

    N, C, H, W = 2, 4, 16, 16
    # Native bf16 activations (no f32 copy of x in HBM).
    x = jax.random.normal(kx, (N, C, H, W), jnp.float32).astype(jnp.bfloat16)

    fan_in = 2 * K * K
    bound = 1.0 / float(np.sqrt(fan_in))
    weight = jax.random.uniform(kw, (1, 2, K, K), jnp.float32, -bound, bound)
    bias = jax.random.uniform(kb, (1,), jnp.float32, -bound, bound)

    out = spatial_attention(x, weight, bias)
    out = jax.block_until_ready(out)

    ref = _reference(x.astype(jnp.float32), weight, bias)
    assert out.shape == (N, 1, H, W)
    err = float(jnp.max(jnp.abs(out - ref)))
    # bf16 MXU taps on a sigmoid output in (0, 1): expected ~1e-3 max deviation.
    assert err < 1e-2, f"mismatch vs reference: max abs err {err}"

    print("KERNEL_OK")
</pallas_src>

<mosaic_0001>
module attributes {stable_mosaic.version = 11 : i64} {
  func.func @kernel(%arg0: i32, %arg1: i32, %arg2: memref<1xf32, #tpu.memory_space<smem>>, %arg3: memref<7x2x16x16xbf16, #tpu.memory_space<vmem>>, %arg4: memref<7x16x16xbf16, #tpu.memory_space<vmem>>, %arg5: memref<1x4x16x16xbf16, #tpu.memory_space<vmem>>, %arg6: memref<1x16x16xf32, #tpu.memory_space<vmem>>, %arg7: memref<1x16x16xf32, #tpu.memory_space<vmem>>, %arg8: memref<1x16x16xf32, #tpu.memory_space<vmem>>) attributes {dimension_semantics = [#tpu.dimension_semantics<parallel>, #tpu.dimension_semantics<arbitrary>], iteration_bounds = array<i64: 2, 1>, scalar_prefetch = 0 : i64, scratch_operands = 2 : i64, tpu.core_type = #tpu.core_type<tc>, window_params = [{transform_indices = @transform_0, window_bounds = array<i64: 1>}, {pipeline_mode = #tpu.pipeline_mode<synchronous>, transform_indices = @transform_1, window_bounds = array<i64: 7, 2, 16, 16>}, {pipeline_mode = #tpu.pipeline_mode<synchronous>, transform_indices = @transform_2, window_bounds = array<i64: 7, 16, 16>}, {transform_indices = @transform_3, window_bounds = array<i64: 1, 4, 16, 16>}, {transform_indices = @transform_4, window_bounds = array<i64: 1, 16, 16>}]} {
    %c0_i32 = arith.constant 0 : i32
    %0 = arith.cmpi eq, %arg1, %c0_i32 : i32
    %1 = arith.extui %0 : i1 to i32
    %c0_i32_0 = arith.constant 0 : i32
    %2 = arith.cmpi ne, %1, %c0_i32_0 : i32
    scf.if %2 {
      %cst_19 = arith.constant 0.000000e+00 : f32
      %16 = vector.broadcast %cst_19 : f32 to vector<1x16x16xf32>
      %c0_20 = arith.constant 0 : index
      %c0_21 = arith.constant 0 : index
      %c0_22 = arith.constant 0 : index
      %17 = vector.load %arg7[%c0_20, %c0_21, %c0_22] : memref<1x16x16xf32, #tpu.memory_space<vmem>>, vector<1x16x16xf32>
      tpu.vector_store %arg7[%c0_20, %c0_21, %c0_22], %16 {strides = array<i32>} : memref<1x16x16xf32, #tpu.memory_space<vmem>>, vector<1x16x16xf32>,
      %cst_23 = arith.constant 0xFF800000 : f32
      %18 = vector.broadcast %cst_23 : f32 to vector<1x16x16xf32>
      %c0_24 = arith.constant 0 : index
      %c0_25 = arith.constant 0 : index
      %c0_26 = arith.constant 0 : index
      %19 = vector.load %arg8[%c0_24, %c0_25, %c0_26] : memref<1x16x16xf32, #tpu.memory_space<vmem>>, vector<1x16x16xf32>
      tpu.vector_store %arg8[%c0_24, %c0_25, %c0_26], %18 {strides = array<i32>} : memref<1x16x16xf32, #tpu.memory_space<vmem>>, vector<1x16x16xf32>,
    } else {
    }
    %c0 = arith.constant 0 : index
    %c0_1 = arith.constant 0 : index
    %c0_2 = arith.constant 0 : index
    %c0_3 = arith.constant 0 : index
    %3 = vector.load %arg5[%c0, %c0_1, %c0_2, %c0_3] : memref<1x4x16x16xbf16, #tpu.memory_space<vmem>>, vector<1x4x16x16xbf16>
    %4 = arith.extf %3 : vector<1x4x16x16xbf16> to vector<1x4x16x16xf32>
    %c0_4 = arith.constant 0 : index
    %c0_5 = arith.constant 0 : index
    %c0_6 = arith.constant 0 : index
    %5 = vector.load %arg7[%c0_4, %c0_5, %c0_6] : memref<1x16x16xf32, #tpu.memory_space<vmem>>, vector<1x16x16xf32>
    %cst = arith.constant dense<0.000000e+00> : vector<1x16x16xf32>
    %6 = vector.multi_reduction <add>, %4, %cst [1] : vector<1x4x16x16xf32> to vector<1x16x16xf32>
    %7 = arith.addf %5, %6 : vector<1x16x16xf32>
    %c0_7 = arith.constant 0 : index
    %c0_8 = arith.constant 0 : index
    %c0_9 = arith.constant 0 : index
    %8 = vector.load %arg7[%c0_7, %c0_8, %c0_9] : memref<1x16x16xf32, #tpu.memory_space<vmem>>, vector<1x16x16xf32>
    tpu.vector_store %arg7[%c0_7, %c0_8, %c0_9], %7 {strides = array<i32>} : memref<1x16x16xf32, #tpu.memory_space<vmem>>, vector<1x16x16xf32>,
    %c0_10 = arith.constant 0 : index
    %c0_11 = arith.constant 0 : index
    %c0_12 = arith.constant 0 : index
    %9 = vector.load %arg8[%c0_10, %c0_11, %c0_12] : memref<1x16x16xf32, #tpu.memory_space<vmem>>, vector<1x16x16xf32>
    %cst_13 = arith.constant dense<0xFF800000> : vector<1x16x16xf32>
    %10 = vector.multi_reduction <maximumf>, %4, %cst_13 [1] : vector<1x4x16x16xf32> to vector<1x16x16xf32>
    %11 = arith.maximumf %9, %10 : vector<1x16x16xf32>
    %c0_14 = arith.constant 0 : index
    %c0_15 = arith.constant 0 : index
    %c0_16 = arith.constant 0 : index
    %12 = vector.load %arg8[%c0_14, %c0_15, %c0_16] : memref<1x16x16xf32, #tpu.memory_space<vmem>>, vector<1x16x16xf32>
    tpu.vector_store %arg8[%c0_14, %c0_15, %c0_16], %11 {strides = array<i32>} : memref<1x16x16xf32, #tpu.memory_space<vmem>>, vector<1x16x16xf32>,
    %c0_i32_17 = arith.constant 0 : i32
    %13 = arith.cmpi eq, %arg1, %c0_i32_17 : i32
    %14 = arith.extui %13 : i1 to i32
    %c0_i32_18 = arith.constant 0 : i32
    %15 = arith.cmpi ne, %14, %c0_i32_18 : i32
    scf.if %15 {
      %c0_19 = arith.constant 0 : index
      %16 = memref.load %arg2[%c0_19] : memref<1xf32, #tpu.memory_space<smem>>
      %c0_20 = arith.constant 0 : index
      %c0_21 = arith.constant 0 : index
      %c0_22 = arith.constant 0 : index
      %17 = vector.load %arg7[%c0_20, %c0_21, %c0_22] : memref<1x16x16xf32, #tpu.memory_space<vmem>>, vector<1x16x16xf32>
      %18 = vector.shape_cast %17 : vector<1x16x16xf32> to vector<16x16xf32>
      %19 = arith.truncf %18 : vector<16x16xf32> to vector<16x16xbf16>
      %c0_23 = arith.constant 0 : index
      %c0_24 = arith.constant 0 : index
      %c0_25 = arith.constant 0 : index
      %20 = vector.load %arg8[%c0_23, %c0_24, %c0_25] : memref<1x16x16xf32, #tpu.memory_space<vmem>>, vector<1x16x16xf32>
      %21 = vector.shape_cast %20 : vector<1x16x16xf32> to vector<16x16xf32>
      %22 = arith.truncf %21 : vector<16x16xf32> to vector<16x16xbf16>
      %cst_26 = arith.constant 0.000000e+00 : f32
      %23 = vector.broadcast %cst_26 : f32 to vector<16x16xf32>
      %c0_27 = arith.constant 0 : index
      %c0_28 = arith.constant 0 : index
      %c0_29 = arith.constant 0 : index
      %24 = vector.load %arg6[%c0_27, %c0_28, %c0_29] : memref<1x16x16xf32, #tpu.memory_space<vmem>>, vector<1x16x16xf32>
      %25 = vector.shape_cast %24 : vector<1x16x16xf32> to vector<16x16xf32>
      %26 = vector.shape_cast %23 : vector<16x16xf32> to vector<1x16x16xf32>
      tpu.vector_store %arg6[%c0_27, %c0_28, %c0_29], %26 {strides = array<i32>} : memref<1x16x16xf32, #tpu.memory_space<vmem>>, vector<1x16x16xf32>,
      %c0_30 = arith.constant 0 : index
      %c0_31 = arith.constant 0 : index
      %c0_32 = arith.constant 0 : index
      %c0_33 = arith.constant 0 : index
      %27 = vector.load %arg3[%c0_30, %c0_31, %c0_32, %c0_33] : memref<7x2x16x16xbf16, #tpu.memory_space<vmem>>, vector<1x1x16x16xbf16>
      %28 = vector.shape_cast %27 : vector<1x1x16x16xbf16> to vector<16x16xbf16>
      %cst_34 = arith.constant dense<0.000000e+00> : vector<16x16xf32>
      %29 = tpu.matmul %19, %28, %cst_34 {dimension_numbers = #tpu.dot_dimension_numbers<[1], [0], [0], [1], [0, 0, 1, 1], [], []>} : vector<16x16xbf16>, vector<16x16xbf16>, vector<16x16xf32> -> vector<16x16xf32>
      %c0_35 = arith.constant 0 : index
      %c1 = arith.constant 1 : index
      %c0_36 = arith.constant 0 : index
      %c0_37 = arith.constant 0 : index
      %30 = vector.load %arg3[%c0_35, %c1, %c0_36, %c0_37] : memref<7x2x16x16xbf16, #tpu.memory_space<vmem>>, vector<1x1x16x16xbf16>
      %31 = vector.shape_cast %30 : vector<1x1x16x16xbf16> to vector<16x16xbf16>
      %cst_38 = arith.constant dense<0.000000e+00> : vector<16x16xf32>
      %32 = tpu.matmul %22, %31, %cst_38 {dimension_numbers = #tpu.dot_dimension_numbers<[1], [0], [0], [1], [0, 0, 1, 1], [], []>} : vector<16x16xbf16>, vector<16x16xbf16>, vector<16x16xf32> -> vector<16x16xf32>
      %33 = arith.addf %29, %32 : vector<16x16xf32>
      %c0_39 = arith.constant 0 : index
      %c0_40 = arith.constant 0 : index
      %c0_41 = arith.constant 0 : index
      %34 = vector.load %arg6[%c0_39, %c0_40, %c0_41] : memref<1x16x16xf32, #tpu.memory_space<vmem>>, vector<1x16x16xf32>
      %35 = vector.shape_cast %34 : vector<1x16x16xf32> to vector<16x16xf32>
      %c0_42 = arith.constant 0 : index
      %c0_43 = arith.constant 0 : index
      %c0_44 = arith.constant 0 : index
      %36 = vector.load %arg4[%c0_42, %c0_43, %c0_44] : memref<7x16x16xbf16, #tpu.memory_space<vmem>>, vector<1x16x16xbf16>
      %37 = vector.shape_cast %36 : vector<1x16x16xbf16> to vector<16x16xbf16>
      %38 = arith.truncf %33 : vector<16x16xf32> to vector<16x16xbf16>
      %cst_45 = arith.constant dense<0.000000e+00> : vector<16x16xf32>
      %39 = tpu.matmul %37, %38, %cst_45 {dimension_numbers = #tpu.dot_dimension_numbers<[1], [0], [0], [1], [0, 0, 1, 1], [], []>} : vector<16x16xbf16>, vector<16x16xbf16>, vector<16x16xf32> -> vector<16x16xf32>
      %40 = arith.addf %35, %39 : vector<16x16xf32>
      %c0_46 = arith.constant 0 : index
      %c0_47 = arith.constant 0 : index
      %c0_48 = arith.constant 0 : index
      %41 = vector.load %arg6[%c0_46, %c0_47, %c0_48] : memref<1x16x16xf32, #tpu.memory_space<vmem>>, vector<1x16x16xf32>
      %42 = vector.shape_cast %41 : vector<1x16x16xf32> to vector<16x16xf32>
      %43 = vector.shape_cast %40 : vector<16x16xf32> to vector<1x16x16xf32>
      tpu.vector_store %arg6[%c0_46, %c0_47, %c0_48], %43 {strides = array<i32>} : memref<1x16x16xf32, #tpu.memory_space<vmem>>, vector<1x16x16xf32>,
      %c1_49 = arith.constant 1 : index
      %c0_50 = arith.constant 0 : index
      %c0_51 = arith.constant 0 : index
      %c0_52 = arith.constant 0 : index
      %44 = vector.load %arg3[%c1_49, %c0_50, %c0_51, %c0_52] : memref<7x2x16x16xbf16, #tpu.memory_space<vmem>>, vector<1x1x16x16xbf16>
      %45 = vector.shape_cast %44 : vector<1x1x16x16xbf16> to vector<16x16xbf16>
      %cst_53 = arith.constant dense<0.000000e+00> : vector<16x16xf32>
      %46 = tpu.matmul %19, %45, %cst_53 {dimension_numbers = #tpu.dot_dimension_numbers<[1], [0], [0], [1], [0, 0, 1, 1], [], []>} : vector<16x16xbf16>, vector<16x16xbf16>, vector<16x16xf32> -> vector<16x16xf32>
      %c1_54 = arith.constant 1 : index
      %c1_55 = arith.constant 1 : index
      %c0_56 = arith.constant 0 : index
      %c0_57 = arith.constant 0 : index
      %47 = vector.load %arg3[%c1_54, %c1_55, %c0_56, %c0_57] : memref<7x2x16x16xbf16, #tpu.memory_space<vmem>>, vector<1x1x16x16xbf16>
      %48 = vector.shape_cast %47 : vector<1x1x16x16xbf16> to vector<16x16xbf16>
      %cst_58 = arith.constant dense<0.000000e+00> : vector<16x16xf32>
      %49 = tpu.matmul %22, %48, %cst_58 {dimension_numbers = #tpu.dot_dimension_numbers<[1], [0], [0], [1], [0, 0, 1, 1], [], []>} : vector<16x16xbf16>, vector<16x16xbf16>, vector<16x16xf32> -> vector<16x16xf32>
      %50 = arith.addf %46, %49 : vector<16x16xf32>
      %c0_59 = arith.constant 0 : index
      %c0_60 = arith.constant 0 : index
      %c0_61 = arith.constant 0 : index
      %51 = vector.load %arg6[%c0_59, %c0_60, %c0_61] : memref<1x16x16xf32, #tpu.memory_space<vmem>>, vector<1x16x16xf32>
      %52 = vector.shape_cast %51 : vector<1x16x16xf32> to vector<16x16xf32>
      %c1_62 = arith.constant 1 : index
      %c0_63 = arith.constant 0 : index
      %c0_64 = arith.constant 0 : index
      %53 = vector.load %arg4[%c1_62, %c0_63, %c0_64] : memref<7x16x16xbf16, #tpu.memory_space<vmem>>, vector<1x16x16xbf16>
      %54 = vector.shape_cast %53 : vector<1x16x16xbf16> to vector<16x16xbf16>
      %55 = arith.truncf %50 : vector<16x16xf32> to vector<16x16xbf16>
      %cst_65 = arith.constant dense<0.000000e+00> : vector<16x16xf32>
      %56 = tpu.matmul %54, %55, %cst_65 {dimension_numbers = #tpu.dot_dimension_numbers<[1], [0], [0], [1], [0, 0, 1, 1], [], []>} : vector<16x16xbf16>, vector<16x16xbf16>, vector<16x16xf32> -> vector<16x16xf32>
      %57 = arith.addf %52, %56 : vector<16x16xf32>
      %c0_66 = arith.constant 0 : index
      %c0_67 = arith.constant 0 : index
      %c0_68 = arith.constant 0 : index
      %58 = vector.load %arg6[%c0_66, %c0_67, %c0_68] : memref<1x16x16xf32, #tpu.memory_space<vmem>>, vector<1x16x16xf32>
      %59 = vector.shape_cast %58 : vector<1x16x16xf32> to vector<16x16xf32>
      %60 = vector.shape_cast %57 : vector<16x16xf32> to vector<1x16x16xf32>
      tpu.vector_store %arg6[%c0_66, %c0_67, %c0_68], %60 {strides = array<i32>} : memref<1x16x16xf32, #tpu.memory_space<vmem>>, vector<1x16x16xf32>,
      %c2 = arith.constant 2 : index
      %c0_69 = arith.constant 0 : index
      %c0_70 = arith.constant 0 : index
      %c0_71 = arith.constant 0 : index
      %61 = vector.load %arg3[%c2, %c0_69, %c0_70, %c0_71] : memref<7x2x16x16xbf16, #tpu.memory_space<vmem>>, vector<1x1x16x16xbf16>
      %62 = vector.shape_cast %61 : vector<1x1x16x16xbf16> to vector<16x16xbf16>
      %cst_72 = arith.constant dense<0.000000e+00> : vector<16x16xf32>
      %63 = tpu.matmul %19, %62, %cst_72 {dimension_numbers = #tpu.dot_dimension_numbers<[1], [0], [0], [1], [0, 0, 1, 1], [], []>} : vector<16x16xbf16>, vector<16x16xbf16>, vector<16x16xf32> -> vector<16x16xf32>
      %c2_73 = arith.constant 2 : index
      %c1_74 = arith.constant 1 : index
      %c0_75 = arith.constant 0 : index
      %c0_76 = arith.constant 0 : index
      %64 = vector.load %arg3[%c2_73, %c1_74, %c0_75, %c0_76] : memref<7x2x16x16xbf16, #tpu.memory_space<vmem>>, vector<1x1x16x16xbf16>
      %65 = vector.shape_cast %64 : vector<1x1x16x16xbf16> to vector<16x16xbf16>
      %cst_77 = arith.constant dense<0.000000e+00> : vector<16x16xf32>
      %66 = tpu.matmul %22, %65, %cst_77 {dimension_numbers = #tpu.dot_dimension_numbers<[1], [0], [0], [1], [0, 0, 1, 1], [], []>} : vector<16x16xbf16>, vector<16x16xbf16>, vector<16x16xf32> -> vector<16x16xf32>
      %67 = arith.addf %63, %66 : vector<16x16xf32>
      %c0_78 = arith.constant 0 : index
      %c0_79 = arith.constant 0 : index
      %c0_80 = arith.constant 0 : index
      %68 = vector.load %arg6[%c0_78, %c0_79, %c0_80] : memref<1x16x16xf32, #tpu.memory_space<vmem>>, vector<1x16x16xf32>
      %69 = vector.shape_cast %68 : vector<1x16x16xf32> to vector<16x16xf32>
      %c2_81 = arith.constant 2 : index
      %c0_82 = arith.constant 0 : index
      %c0_83 = arith.constant 0 : index
      %70 = vector.load %arg4[%c2_81, %c0_82, %c0_83] : memref<7x16x16xbf16, #tpu.memory_space<vmem>>, vector<1x16x16xbf16>
      %71 = vector.shape_cast %70 : vector<1x16x16xbf16> to vector<16x16xbf16>
      %72 = arith.truncf %67 : vector<16x16xf32> to vector<16x16xbf16>
      %cst_84 = arith.constant dense<0.000000e+00> : vector<16x16xf32>
      %73 = tpu.matmul %71, %72, %cst_84 {dimension_numbers = #tpu.dot_dimension_numbers<[1], [0], [0], [1], [0, 0, 1, 1], [], []>} : vector<16x16xbf16>, vector<16x16xbf16>, vector<16x16xf32> -> vector<16x16xf32>
      %74 = arith.addf %69, %73 : vector<16x16xf32>
      %c0_85 = arith.constant 0 : index
      %c0_86 = arith.constant 0 : index
      %c0_87 = arith.constant 0 : index
      %75 = vector.load %arg6[%c0_85, %c0_86, %c0_87] : memref<1x16x16xf32, #tpu.memory_space<vmem>>, vector<1x16x16xf32>
      %76 = vector.shape_cast %75 : vector<1x16x16xf32> to vector<16x16xf32>
      %77 = vector.shape_cast %74 : vector<16x16xf32> to vector<1x16x16xf32>
      tpu.vector_store %arg6[%c0_85, %c0_86, %c0_87], %77 {strides = array<i32>} : memref<1x16x16xf32, #tpu.memory_space<vmem>>, vector<1x16x16xf32>,
      %c3 = arith.constant 3 : index
      %c0_88 = arith.constant 0 : index
      %c0_89 = arith.constant 0 : index
      %c0_90 = arith.constant 0 : index
      %78 = vector.load %arg3[%c3, %c0_88, %c0_89, %c0_90] : memref<7x2x16x16xbf16, #tpu.memory_space<vmem>>, vector<1x1x16x16xbf16>
      %79 = vector.shape_cast %78 : vector<1x1x16x16xbf16> to vector<16x16xbf16>
      %cst_91 = arith.constant dense<0.000000e+00> : vector<16x16xf32>
      %80 = tpu.matmul %19, %79, %cst_91 {dimension_numbers = #tpu.dot_dimension_numbers<[1], [0], [0], [1], [0, 0, 1, 1], [], []>} : vector<16x16xbf16>, vector<16x16xbf16>, vector<16x16xf32> -> vector<16x16xf32>
      %c3_92 = arith.constant 3 : index
      %c1_93 = arith.constant 1 : index
      %c0_94 = arith.constant 0 : index
      %c0_95 = arith.constant 0 : index
      %81 = vector.load %arg3[%c3_92, %c1_93, %c0_94, %c0_95] : memref<7x2x16x16xbf16, #tpu.memory_space<vmem>>, vector<1x1x16x16xbf16>
      %82 = vector.shape_cast %81 : vector<1x1x16x16xbf16> to vector<16x16xbf16>
      %cst_96 = arith.constant dense<0.000000e+00> : vector<16x16xf32>
      %83 = tpu.matmul %22, %82, %cst_96 {dimension_numbers = #tpu.dot_dimension_numbers<[1], [0], [0], [1], [0, 0, 1, 1], [], []>} : vector<16x16xbf16>, vector<16x16xbf16>, vector<16x16xf32> -> vector<16x16xf32>
      %84 = arith.addf %80, %83 : vector<16x16xf32>
      %c0_97 = arith.constant 0 : index
      %c0_98 = arith.constant 0 : index
      %c0_99 = arith.constant 0 : index
      %85 = vector.load %arg6[%c0_97, %c0_98, %c0_99] : memref<1x16x16xf32, #tpu.memory_space<vmem>>, vector<1x16x16xf32>
      %86 = vector.shape_cast %85 : vector<1x16x16xf32> to vector<16x16xf32>
      %c3_100 = arith.constant 3 : index
      %c0_101 = arith.constant 0 : index
      %c0_102 = arith.constant 0 : index
      %87 = vector.load %arg4[%c3_100, %c0_101, %c0_102] : memref<7x16x16xbf16, #tpu.memory_space<vmem>>, vector<1x16x16xbf16>
      %88 = vector.shape_cast %87 : vector<1x16x16xbf16> to vector<16x16xbf16>
      %89 = arith.truncf %84 : vector<16x16xf32> to vector<16x16xbf16>
      %cst_103 = arith.constant dense<0.000000e+00> : vector<16x16xf32>
      %90 = tpu.matmul %88, %89, %cst_103 {dimension_numbers = #tpu.dot_dimension_numbers<[1], [0], [0], [1], [0, 0, 1, 1], [], []>} : vector<16x16xbf16>, vector<16x16xbf16>, vector<16x16xf32> -> vector<16x16xf32>
      %91 = arith.addf %86, %90 : vector<16x16xf32>
      %c0_104 = arith.constant 0 : index
      %c0_105 = arith.constant 0 : index
      %c0_106 = arith.constant 0 : index
      %92 = vector.load %arg6[%c0_104, %c0_105, %c0_106] : memref<1x16x16xf32, #tpu.memory_space<vmem>>, vector<1x16x16xf32>
      %93 = vector.shape_cast %92 : vector<1x16x16xf32> to vector<16x16xf32>
      %94 = vector.shape_cast %91 : vector<16x16xf32> to vector<1x16x16xf32>
      tpu.vector_store %arg6[%c0_104, %c0_105, %c0_106], %94 {strides = array<i32>} : memref<1x16x16xf32, #tpu.memory_space<vmem>>, vector<1x16x16xf32>,
      %c4 = arith.constant 4 : index
      %c0_107 = arith.constant 0 : index
      %c0_108 = arith.constant 0 : index
      %c0_109 = arith.constant 0 : index
      %95 = vector.load %arg3[%c4, %c0_107, %c0_108, %c0_109] : memref<7x2x16x16xbf16, #tpu.memory_space<vmem>>, vector<1x1x16x16xbf16>
      %96 = vector.shape_cast %95 : vector<1x1x16x16xbf16> to vector<16x16xbf16>
      %cst_110 = arith.constant dense<0.000000e+00> : vector<16x16xf32>
      %97 = tpu.matmul %19, %96, %cst_110 {dimension_numbers = #tpu.dot_dimension_numbers<[1], [0], [0], [1], [0, 0, 1, 1], [], []>} : vector<16x16xbf16>, vector<16x16xbf16>, vector<16x16xf32> -> vector<16x16xf32>
      %c4_111 = arith.constant 4 : index
      %c1_112 = arith.constant 1 : index
      %c0_113 = arith.constant 0 : index
      %c0_114 = arith.constant 0 : index
      %98 = vector.load %arg3[%c4_111, %c1_112, %c0_113, %c0_114] : memref<7x2x16x16xbf16, #tpu.memory_space<vmem>>, vector<1x1x16x16xbf16>
      %99 = vector.shape_cast %98 : vector<1x1x16x16xbf16> to vector<16x16xbf16>
      %cst_115 = arith.constant dense<0.000000e+00> : vector<16x16xf32>
      %100 = tpu.matmul %22, %99, %cst_115 {dimension_numbers = #tpu.dot_dimension_numbers<[1], [0], [0], [1], [0, 0, 1, 1], [], []>} : vector<16x16xbf16>, vector<16x16xbf16>, vector<16x16xf32> -> vector<16x16xf32>
      %101 = arith.addf %97, %100 : vector<16x16xf32>
      %c0_116 = arith.constant 0 : index
      %c0_117 = arith.constant 0 : index
      %c0_118 = arith.constant 0 : index
      %102 = vector.load %arg6[%c0_116, %c0_117, %c0_118] : memref<1x16x16xf32, #tpu.memory_space<vmem>>, vector<1x16x16xf32>
      %103 = vector.shape_cast %102 : vector<1x16x16xf32> to vector<16x16xf32>
      %c4_119 = arith.constant 4 : index
      %c0_120 = arith.constant 0 : index
      %c0_121 = arith.constant 0 : index
      %104 = vector.load %arg4[%c4_119, %c0_120, %c0_121] : memref<7x16x16xbf16, #tpu.memory_space<vmem>>, vector<1x16x16xbf16>
      %105 = vector.shape_cast %104 : vector<1x16x16xbf16> to vector<16x16xbf16>
      %106 = arith.truncf %101 : vector<16x16xf32> to vector<16x16xbf16>
      %cst_122 = arith.constant dense<0.000000e+00> : vector<16x16xf32>
      %107 = tpu.matmul %105, %106, %cst_122 {dimension_numbers = #tpu.dot_dimension_numbers<[1], [0], [0], [1], [0, 0, 1, 1], [], []>} : vector<16x16xbf16>, vector<16x16xbf16>, vector<16x16xf32> -> vector<16x16xf32>
      %108 = arith.addf %103, %107 : vector<16x16xf32>
      %c0_123 = arith.constant 0 : index
      %c0_124 = arith.constant 0 : index
      %c0_125 = arith.constant 0 : index
      %109 = vector.load %arg6[%c0_123, %c0_124, %c0_125] : memref<1x16x16xf32, #tpu.memory_space<vmem>>, vector<1x16x16xf32>
      %110 = vector.shape_cast %109 : vector<1x16x16xf32> to vector<16x16xf32>
      %111 = vector.shape_cast %108 : vector<16x16xf32> to vector<1x16x16xf32>
      tpu.vector_store %arg6[%c0_123, %c0_124, %c0_125], %111 {strides = array<i32>} : memref<1x16x16xf32, #tpu.memory_space<vmem>>, vector<1x16x16xf32>,
      %c5 = arith.constant 5 : index
      %c0_126 = arith.constant 0 : index
      %c0_127 = arith.constant 0 : index
      %c0_128 = arith.constant 0 : index
      %112 = vector.load %arg3[%c5, %c0_126, %c0_127, %c0_128] : memref<7x2x16x16xbf16, #tpu.memory_space<vmem>>, vector<1x1x16x16xbf16>
      %113 = vector.shape_cast %112 : vector<1x1x16x16xbf16> to vector<16x16xbf16>
      %cst_129 = arith.constant dense<0.000000e+00> : vector<16x16xf32>
      %114 = tpu.matmul %19, %113, %cst_129 {dimension_numbers = #tpu.dot_dimension_numbers<[1], [0], [0], [1], [0, 0, 1, 1], [], []>} : vector<16x16xbf16>, vector<16x16xbf16>, vector<16x16xf32> -> vector<16x16xf32>
      %c5_130 = arith.constant 5 : index
      %c1_131 = arith.constant 1 : index
      %c0_132 = arith.constant 0 : index
      %c0_133 = arith.constant 0 : index
      %115 = vector.load %arg3[%c5_130, %c1_131, %c0_132, %c0_133] : memref<7x2x16x16xbf16, #tpu.memory_space<vmem>>, vector<1x1x16x16xbf16>
      %116 = vector.shape_cast %115 : vector<1x1x16x16xbf16> to vector<16x16xbf16>
      %cst_134 = arith.constant dense<0.000000e+00> : vector<16x16xf32>
      %117 = tpu.matmul %22, %116, %cst_134 {dimension_numbers = #tpu.dot_dimension_numbers<[1], [0], [0], [1], [0, 0, 1, 1], [], []>} : vector<16x16xbf16>, vector<16x16xbf16>, vector<16x16xf32> -> vector<16x16xf32>
      %118 = arith.addf %114, %117 : vector<16x16xf32>
      %c0_135 = arith.constant 0 : index
      %c0_136 = arith.constant 0 : index
      %c0_137 = arith.constant 0 : index
      %119 = vector.load %arg6[%c0_135, %c0_136, %c0_137] : memref<1x16x16xf32, #tpu.memory_space<vmem>>, vector<1x16x16xf32>
      %120 = vector.shape_cast %119 : vector<1x16x16xf32> to vector<16x16xf32>
      %c5_138 = arith.constant 5 : index
      %c0_139 = arith.constant 0 : index
      %c0_140 = arith.constant 0 : index
      %121 = vector.load %arg4[%c5_138, %c0_139, %c0_140] : memref<7x16x16xbf16, #tpu.memory_space<vmem>>, vector<1x16x16xbf16>
      %122 = vector.shape_cast %121 : vector<1x16x16xbf16> to vector<16x16xbf16>
      %123 = arith.truncf %118 : vector<16x16xf32> to vector<16x16xbf16>
      %cst_141 = arith.constant dense<0.000000e+00> : vector<16x16xf32>
      %124 = tpu.matmul %122, %123, %cst_141 {dimension_numbers = #tpu.dot_dimension_numbers<[1], [0], [0], [1], [0, 0, 1, 1], [], []>} : vector<16x16xbf16>, vector<16x16xbf16>, vector<16x16xf32> -> vector<16x16xf32>
      %125 = arith.addf %120, %124 : vector<16x16xf32>
      %c0_142 = arith.constant 0 : index
      %c0_143 = arith.constant 0 : index
      %c0_144 = arith.constant 0 : index
      %126 = vector.load %arg6[%c0_142, %c0_143, %c0_144] : memref<1x16x16xf32, #tpu.memory_space<vmem>>, vector<1x16x16xf32>
      %127 = vector.shape_cast %126 : vector<1x16x16xf32> to vector<16x16xf32>
      %128 = vector.shape_cast %125 : vector<16x16xf32> to vector<1x16x16xf32>
      tpu.vector_store %arg6[%c0_142, %c0_143, %c0_144], %128 {strides = array<i32>} : memref<1x16x16xf32, #tpu.memory_space<vmem>>, vector<1x16x16xf32>,
      %c6 = arith.constant 6 : index
      %c0_145 = arith.constant 0 : index
      %c0_146 = arith.constant 0 : index
      %c0_147 = arith.constant 0 : index
      %129 = vector.load %arg3[%c6, %c0_145, %c0_146, %c0_147] : memref<7x2x16x16xbf16, #tpu.memory_space<vmem>>, vector<1x1x16x16xbf16>
      %130 = vector.shape_cast %129 : vector<1x1x16x16xbf16> to vector<16x16xbf16>
      %cst_148 = arith.constant dense<0.000000e+00> : vector<16x16xf32>
      %131 = tpu.matmul %19, %130, %cst_148 {dimension_numbers = #tpu.dot_dimension_numbers<[1], [0], [0], [1], [0, 0, 1, 1], [], []>} : vector<16x16xbf16>, vector<16x16xbf16>, vector<16x16xf32> -> vector<16x16xf32>
      %c6_149 = arith.constant 6 : index
      %c1_150 = arith.constant 1 : index
      %c0_151 = arith.constant 0 : index
      %c0_152 = arith.constant 0 : index
      %132 = vector.load %arg3[%c6_149, %c1_150, %c0_151, %c0_152] : memref<7x2x16x16xbf16, #tpu.memory_space<vmem>>, vector<1x1x16x16xbf16>
      %133 = vector.shape_cast %132 : vector<1x1x16x16xbf16> to vector<16x16xbf16>
      %cst_153 = arith.constant dense<0.000000e+00> : vector<16x16xf32>
      %134 = tpu.matmul %22, %133, %cst_153 {dimension_numbers = #tpu.dot_dimension_numbers<[1], [0], [0], [1], [0, 0, 1, 1], [], []>} : vector<16x16xbf16>, vector<16x16xbf16>, vector<16x16xf32> -> vector<16x16xf32>
      %135 = arith.addf %131, %134 : vector<16x16xf32>
      %c0_154 = arith.constant 0 : index
      %c0_155 = arith.constant 0 : index
      %c0_156 = arith.constant 0 : index
      %136 = vector.load %arg6[%c0_154, %c0_155, %c0_156] : memref<1x16x16xf32, #tpu.memory_space<vmem>>, vector<1x16x16xf32>
      %137 = vector.shape_cast %136 : vector<1x16x16xf32> to vector<16x16xf32>
      %c6_157 = arith.constant 6 : index
      %c0_158 = arith.constant 0 : index
      %c0_159 = arith.constant 0 : index
      %138 = vector.load %arg4[%c6_157, %c0_158, %c0_159] : memref<7x16x16xbf16, #tpu.memory_space<vmem>>, vector<1x16x16xbf16>
      %139 = vector.shape_cast %138 : vector<1x16x16xbf16> to vector<16x16xbf16>
      %140 = arith.truncf %135 : vector<16x16xf32> to vector<16x16xbf16>
      %cst_160 = arith.constant dense<0.000000e+00> : vector<16x16xf32>
      %141 = tpu.matmul %139, %140, %cst_160 {dimension_numbers = #tpu.dot_dimension_numbers<[1], [0], [0], [1], [0, 0, 1, 1], [], []>} : vector<16x16xbf16>, vector<16x16xbf16>, vector<16x16xf32> -> vector<16x16xf32>
      %142 = arith.addf %137, %141 : vector<16x16xf32>
      %c0_161 = arith.constant 0 : index
      %c0_162 = arith.constant 0 : index
      %c0_163 = arith.constant 0 : index
      %143 = vector.load %arg6[%c0_161, %c0_162, %c0_163] : memref<1x16x16xf32, #tpu.memory_space<vmem>>, vector<1x16x16xf32>
      %144 = vector.shape_cast %143 : vector<1x16x16xf32> to vector<16x16xf32>
      %145 = vector.shape_cast %142 : vector<16x16xf32> to vector<1x16x16xf32>
      tpu.vector_store %arg6[%c0_161, %c0_162, %c0_163], %145 {strides = array<i32>} : memref<1x16x16xf32, #tpu.memory_space<vmem>>, vector<1x16x16xf32>,
      %c0_164 = arith.constant 0 : index
      %c0_165 = arith.constant 0 : index
      %c0_166 = arith.constant 0 : index
      %146 = vector.load %arg6[%c0_164, %c0_165, %c0_166] : memref<1x16x16xf32, #tpu.memory_space<vmem>>, vector<1x16x16xf32>
      %147 = vector.shape_cast %146 : vector<1x16x16xf32> to vector<16x16xf32>
      %148 = vector.broadcast %16 : f32 to vector<16x16xf32>
      %149 = arith.addf %147, %148 : vector<16x16xf32>
      %150 = arith.negf %149 : vector<16x16xf32>
      %151 = math.exp %150 : vector<16x16xf32>
      %cst_167 = arith.constant 1.000000e+00 : f32
      %152 = vector.broadcast %cst_167 : f32 to vector<16x16xf32>
      %153 = arith.addf %152, %151 : vector<16x16xf32>
      %154 = arith.divf %152, %153 : vector<16x16xf32>
      %c0_168 = arith.constant 0 : index
      %c0_169 = arith.constant 0 : index
      %c0_170 = arith.constant 0 : index
      %155 = vector.load %arg6[%c0_168, %c0_169, %c0_170] : memref<1x16x16xf32, #tpu.memory_space<vmem>>, vector<1x16x16xf32>
      %156 = vector.shape_cast %155 : vector<1x16x16xf32> to vector<16x16xf32>
      %157 = vector.shape_cast %154 : vector<16x16xf32> to vector<1x16x16xf32>
      tpu.vector_store %arg6[%c0_168, %c0_169, %c0_170], %157 {strides = array<i32>} : memref<1x16x16xf32, #tpu.memory_space<vmem>>, vector<1x16x16xf32>,
    } else {
    }
    return
  }
  func.func @transform_0(%arg0: i32, %arg1: i32) -> i32 {
    %c0_i32 = arith.constant 0 : i32
    %c0_i32_0 = arith.constant 0 : i32
    return %c0_i32 : i32
  }
  func.func @transform_1(%arg0: i32, %arg1: i32) -> (i32, i32, i32, i32) {
    %c0_i32 = arith.constant 0 : i32
    %c0_i32_0 = arith.constant 0 : i32
    %c0_i32_1 = arith.constant 0 : i32
    %c0_i32_2 = arith.constant 0 : i32
    %c0_i32_3 = arith.constant 0 : i32
    return %c0_i32, %c0_i32_0, %c0_i32_1, %c0_i32_2 : i32, i32, i32, i32
  }
  func.func @transform_2(%arg0: i32, %arg1: i32) -> (i32, i32, i32) {
    %c0_i32 = arith.constant 0 : i32
    %c0_i32_0 = arith.constant 0 : i32
    %c0_i32_1 = arith.constant 0 : i32
    %c0_i32_2 = arith.constant 0 : i32
    return %c0_i32, %c0_i32_0, %c0_i32_1 : i32, i32, i32
  }
  func.func @transform_3(%arg0: i32, %arg1: i32) -> (i32, i32, i32, i32) {
    %c0_i32 = arith.constant 0 : i32
    %c0_i32_0 = arith.constant 0 : i32
    %c0_i32_1 = arith.constant 0 : i32
    return %arg0, %arg1, %c0_i32, %c0_i32_0 : i32, i32, i32, i32
  }
  func.func @transform_4(%arg0: i32, %arg1: i32) -> (i32, i32, i32) {
    %c0_i32 = arith.constant 0 : i32
    %c0_i32_0 = arith.constant 0 : i32
    %c0_i32_1 = arith.constant 0 : i32
    return %arg0, %c0_i32, %c0_i32_0 : i32, i32, i32
  }
}

</mosaic_0001>

<llo_original>
// kernel: tpu_custom_call.1
$region0: #{tpu_custom_call.1}
  #allocation0 [shape = 'u32[]', space=smem, size = 0x4, offset = 0x4, fixed_abs, tag = 'smem constant byte address 0x4 - core index']
  #allocation1 [shape = 'u32[72,128]{1,0:T(1,128)}', space=vmem, size = 0x9000, scoped, tag = 'internal scratch']
  #allocation2 [shape = 'f32[1,16,16]{2,1,0:T(8,128)}', space=vmem, size = 0x2000, scoped, tag = 'scratch operand']
  #allocation3 [shape = 'f32[1,16,16]{2,1,0:T(8,128)}', space=vmem, size = 0x2000, scoped, tag = 'scratch operand']
  #allocation4 [shape = 'f32[1]{0:T(128)S(6)}', space=smem, size = 0x200, scoped, tag = 'scoped memory for tpu_custom_call.1']
  %s0 = inlined_call_operand.<no memory space> [shape: f32[1], index: 0, kind: input, shape index: {}]
  %s1 = inlined_call_operand.hbm [shape: bf16[7,2,16,16], index: 1, kind: input, shape index: {}]
  %s2 = inlined_call_operand.hbm [shape: bf16[7,16,16], index: 2, kind: input, shape index: {}]
  %s3 = inlined_call_operand.hbm [shape: bf16[2,4,16,16], index: 3, kind: input, shape index: {}]
  %s4 = inlined_call_operand.hbm [shape: f32[2,16,16], index: 4, kind: output, shape index: {}]
  %s5 = sld [smem:[#allocation0]]
  $region69: #{tpu_custom_call.1} parent=0
    _
  %s7 = ssub.s32 1, %s5
  %s8 = scalar_select 0, %s7, %s5
  %9 = sst [smem:[#allocation4]] %s0
  $region1: #{tpu_custom_call.1} parent=0
    #allocation5 [shape = 'u8[57344]{0}', space=vmem, size = 0xe000, scoped, tag = 'input window, operand 1, single buffered']
    #allocation6 [shape = 's32[2]{0}', space=sflag, size = 0x8, scoped, tag = 'scoped memory for tpu_custom_call.1']
    #allocation7 [shape = 's32[2]{0}', space=sflag, size = 0x8, scoped, tag = 'scoped memory for tpu_custom_call.1']
    #allocation8 [shape = 'u8[28672]{0}', space=vmem, size = 0x7000, scoped, tag = 'input window, operand 2, single buffered']
    #allocation9 [shape = 's32[1]{0}', space=sflag, size = 0x4, scoped, tag = 'scoped memory for tpu_custom_call.1']
    #allocation10 [shape = 'u8[32768]{0}', space=vmem, size = 0x8000, scoped, tag = 'input window, operand 3']
    #allocation11 [shape = 'u8[16384]{0}', space=vmem, size = 0x4000, scoped, tag = 'output window, operand 0']
    %10 = vsyncpa [#allocation6], 0
    %11 = vsyncpa [#allocation9], 0
    %12 = vsyncpa [#allocation7], 0
    %s13 = scalar_lea.sflag [#allocation7], 1
    %14 = vsyncpa %s13, 0
    loop: start=0, step=1, limit=4
    $region2: #{tpu_custom_call.1} parent=1 // loop_pre_header
      _
    $region3: #{tpu_custom_call.1} parent=1 // loop_header
      %s16 = sphi 0, %s20
      %p17 = scmp.ge.s32.totalorder %s16, 4
      %s23 = sphi 0, %s35
      %s24 = sphi 0, %s31
      %s25 = sphi 0, %s23
      %s26 = sphi 0, %s24
      %s27 = sphi 0, %s25
      %s28 = sphi 0, %s26
      %s36 = sphi 0, %s36
      %s38 = sphi 0, %s36
      %s39 = sphi 0, %s38
      %s53 = sphi 0, %s39
      %s57 = sphi 0, %s57
      %s59 = sphi 0, %s57
      %s60 = sphi 0, %s59
      %s74 = sphi 0, %s60
      %s78 = sphi 0, %s78
      %s80 = sphi 0, %s78
      %s81 = sphi 0, %s80
      %s95 = sphi 0, %s81
      %s103 = sphi 0, %s105
      %s106 = sphi 0, %s103
      %s107 = sphi 0, %s106
      %s123 = sphi 0, %s107
      %s129 = sphi 0, %s131
      %s132 = sphi 0, %s129
      %s133 = sphi 0, %s132
      %s149 = sphi 0, %s133
    $region4: #{tpu_custom_call.1} parent=1 // loop_header_branch
      %19 = sbr.rel (%p17) target = $region8
    $region5: #{tpu_custom_call.1} parent=1 // loop_body
      %s21 = ssub.s32 %s16, 1
      %s22 = ssub.s32 %s16, 2
      %s29 = sadd.s32 1, %s24
      %p30 = scmp.ge.s32.totalorder %s29, 1
      %s31 = scalar_select %p30, 0, %s29
      %s32 = sadd.s32 1, %s23
      %s33 = scalar_select %p30, %s32, %s23
      %p34 = scmp.ge.s32.totalorder %s33, 2
      %s35 = scalar_select %p34, 0, %s33
      %s37 = sadd.s32 %s36, 1
      %p40 = scmp.eq.s32.totalorder %s16, 1
      %p41 = scmp.ne.s32.totalorder %s36, %s38
      %p42 = scmp.eq.s32.totalorder %s16, 0
      %p43 = por %p41, %p42
      %p44 = scmp.ne.s32.totalorder %s36, %s38
      %p45 = scmp.eq.s32.totalorder %s21, 1
      %p46 = por %p44, %p45
      %p47 = scmp.ne.s32.totalorder %s38, %s39
      %p48 = scmp.eq.s32.totalorder %s21, 0
      %p49 = por %p47, %p48
      %p50 = scmp.ne.s32.totalorder %s38, %s39
      %p51 = scmp.eq.s32.totalorder %s22, 1
      %p52 = por %p50, %p51
      %p54 = scmp.ne.s32.totalorder %s39, %s53
      %p55 = scmp.eq.s32.totalorder %s22, 0
      %p56 = por %p54, %p55
      %s58 = sadd.s32 %s57, 1
      %p61 = scmp.eq.s32.totalorder %s16, 1
      %p62 = scmp.ne.s32.totalorder %s57, %s59
      %p63 = scmp.eq.s32.totalorder %s16, 0
      %p64 = por %p62, %p63
      %p65 = scmp.ne.s32.totalorder %s57, %s59
      %p66 = scmp.eq.s32.totalorder %s21, 1
      %p67 = por %p65, %p66
      %p68 = scmp.ne.s32.totalorder %s59, %s60
      %p69 = scmp.eq.s32.totalorder %s21, 0
      %p70 = por %p68, %p69
      %p71 = scmp.ne.s32.totalorder %s59, %s60
      %p72 = scmp.eq.s32.totalorder %s22, 1
      %p73 = por %p71, %p72
      %p75 = scmp.ne.s32.totalorder %s60, %s74
      %p76 = scmp.eq.s32.totalorder %s22, 0
      %p77 = por %p75, %p76
      %s79 = sadd.s32 %s78, 1
      %p82 = scmp.eq.s32.totalorder %s16, 1
      %p83 = scmp.ne.s32.totalorder %s78, %s80
      %p84 = scmp.eq.s32.totalorder %s16, 0
      %p85 = por %p83, %p84
      %p86 = scmp.ne.s32.totalorder %s78, %s80
      %p87 = scmp.eq.s32.totalorder %s21, 1
      %p88 = por %p86, %p87
      %p89 = scmp.ne.s32.totalorder %s80, %s81
      %p90 = scmp.eq.s32.totalorder %s21, 0
      %p91 = por %p89, %p90
      %p92 = scmp.ne.s32.totalorder %s80, %s81
      %p93 = scmp.eq.s32.totalorder %s22, 1
      %p94 = por %p92, %p93
      %p96 = scmp.ne.s32.totalorder %s81, %s95
      %p97 = scmp.eq.s32.totalorder %s22, 0
      %p98 = por %p96, %p97
      %s99 = ssub.s32 %s23, %s35
      %s100 = ssub.s32 %s24, %s31
      %s101 = sor.u32 %s99, %s100
      %p102 = scmp.eq.s32.totalorder %s101, 0
      %s104 = sadd.s32 %s103, 1
      %s105 = scalar_select %p102, %s103, %s104
      %p108 = pneg %p102
      %p109 = scmp.eq.s32.totalorder %s16, 1
      %p110 = por %p108, %p109
      %p111 = scmp.ne.s32.totalorder %s103, %s106
      %p112 = scmp.eq.s32.totalorder %s16, 0
      %p113 = por %p111, %p112
      %p114 = scmp.ne.s32.totalorder %s103, %s106
      %p115 = scmp.eq.s32.totalorder %s21, 1
      %p116 = por %p114, %p115
      %p117 = scmp.ne.s32.totalorder %s106, %s107
      %p118 = scmp.eq.s32.totalorder %s21, 0
      %p119 = por %p117, %p118
      %p120 = scmp.ne.s32.totalorder %s106, %s107
      %p121 = scmp.eq.s32.totalorder %s22, 1
      %p122 = por %p120, %p121
      %p124 = scmp.ne.s32.totalorder %s107, %s123
      %p125 = scmp.eq.s32.totalorder %s22, 0
      %p126 = por %p124, %p125
      %s127 = ssub.s32 %s23, %s35
      %p128 = scmp.eq.s32.totalorder %s127, 0
      %s130 = sadd.s32 %s129, 1
      %s131 = scalar_select %p128, %s129, %s130
      %p134 = pneg %p128
      %p135 = scmp.eq.s32.totalorder %s16, 1
      %p136 = por %p134, %p135
      %p137 = scmp.ne.s32.totalorder %s129, %s132
      %p138 = scmp.eq.s32.totalorder %s16, 0
      %p139 = por %p137, %p138
      %p140 = scmp.ne.s32.totalorder %s129, %s132
      %p141 = scmp.eq.s32.totalorder %s21, 1
      %p142 = por %p140, %p141
      %p143 = scmp.ne.s32.totalorder %s132, %s133
      %p144 = scmp.eq.s32.totalorder %s21, 0
      %p145 = por %p143, %p144
      %p146 = scmp.ne.s32.totalorder %s132, %s133
      %p147 = scmp.eq.s32.totalorder %s22, 1
      %p148 = por %p146, %p147
      %p150 = scmp.ne.s32.totalorder %s133, %s149
      %p151 = scmp.eq.s32.totalorder %s22, 0
      %p152 = por %p150, %p151
      %p153 = scmp.le.s32.totalorder 1, %s16
      %p154 = scmp.lt.s32.totalorder %s16, 3
      %p155 = pnand %p153, %p154
      %p156 = pneg %p155
      // Predicated region
      $region9: #{tpu_custom_call.1} parent=5 // pred_check
        _
      $region10: #{tpu_custom_call.1} parent=5 // pred_check_branch
        %158 = sbr.rel (%p155) target = $region12
      $region11: #{tpu_custom_call.1} parent=5 // pred_region
        %s159 = ssub.s32 %s16, 1
        // Predicated region
        $region13: #{tpu_custom_call.1} parent=11 // pred_check
          %p160 = pneg %p49
        $region14: #{tpu_custom_call.1} parent=11 // pred_check_branch
          %162 = sbr.rel (%p160) target = $region16
        $region15: #{tpu_custom_call.1} parent=11 // pred_region
          _
        $region16: #{tpu_custom_call.1} parent=11 // pred_fallthru
          _
        // Predicated region
        $region17: #{tpu_custom_call.1} parent=11 // pred_check
          %p163 = pneg %p70
        $region18: #{tpu_custom_call.1} parent=11 // pred_check_branch
          %165 = sbr.rel (%p163) target = $region20
        $region19: #{tpu_custom_call.1} parent=11 // pred_region
          %167 = vsyncadd [#allocation6], 0
          %s168 = sshll.u32 %s1, 4
          %s169 = int_to_ptr.hbm [resolvable:$true] %s168
          %s170 = sshll.u32 [#allocation5], 4
          %s171 = int_to_ptr.vmem [resolvable:$true] %s170
          %176 = dma.hbm_to_vmem [thread:$0]  %s169, 1792, %s171, [#allocation6], 64, 64, 4
        $region20: #{tpu_custom_call.1} parent=11 // pred_fallthru
          _
        // Predicated region
        $region21: #{tpu_custom_call.1} parent=11 // pred_check
          %p177 = pneg %p91
        $region22: #{tpu_custom_call.1} parent=11 // pred_check_branch
          %179 = sbr.rel (%p177) target = $region24
        $region23: #{tpu_custom_call.1} parent=11 // pred_region
          %181 = vsyncadd [#allocation9], 0
          %s182 = sshll.u32 %s2, 4
          %s183 = int_to_ptr.hbm [resolvable:$true] %s182
          %s184 = sshll.u32 [#allocation8], 4
          %s185 = int_to_ptr.vmem [resolvable:$true] %s184
          %190 = dma.hbm_to_vmem [thread:$0]  %s183, 896, %s185, [#allocation9], 64, 64, 4
        $region24: #{tpu_custom_call.1} parent=11 // pred_fallthru
          _
      $region12: #{tpu_custom_call.1} parent=5 // pred_fallthru
        _
      %p191 = scmp.lt.s32.totalorder %s16, 2
      // Predicated region
      $region25: #{tpu_custom_call.1} parent=5 // pred_check
        %p192 = pneg %p191
      $region26: #{tpu_custom_call.1} parent=5 // pred_check_branch
        %194 = sbr.rel (%p192) target = $region28
      $region27: #{tpu_custom_call.1} parent=5 // pred_region
        // Predicated region
        $region29: #{tpu_custom_call.1} parent=27 // pred_check
          %p195 = pneg %p113
        $region30: #{tpu_custom_call.1} parent=27 // pred_check_branch
          %197 = sbr.rel (%p195) target = $region32
        $region31: #{tpu_custom_call.1} parent=27 // pred_region
          %s198 = sand.u32 %s16, 1
          %s199 = scalar_lea.sflag [#allocation6], %s198
          %s200 = sand.u32 %s103, 1
          %s201 = smul.addr %s200, 32
          %s202 = scalar_lea.vmem [#allocation10], %s201
          %s203 = smul.u32 4, %s24
          %205 = vsyncadd %s199, 0
          %s206 = smul.addr %s203, 2
          %s207 = smul.addr %s23, 8
          %s208 = sadd.s32 %s206, %s207
          %s209 = smul.addr %s208, 4
          %s210 = scalar_lea.hbm %s3, %s209
          %s211 = sshll.u32 %s210, 4
          %s212 = int_to_ptr.hbm [resolvable:$true] %s211
          %s213 = sshll.u32 %s202, 4
          %s214 = int_to_ptr.vmem [resolvable:$true] %s213
          %219 = dma.hbm_to_vmem [thread:$0]  %s212, 512, %s214, %s199, 64, 64, 4
        $region32: #{tpu_custom_call.1} parent=27 // pred_fallthru
          _
      $region28: #{tpu_custom_call.1} parent=5 // pred_fallthru
        _
      %p220 = scmp.le.s32.totalorder 1, %s16
      %p221 = scmp.lt.s32.totalorder %s16, 3
      %p222 = pnand %p220, %p221
      %p223 = pneg %p222
      // Predicated region
      $region33: #{tpu_custom_call.1} parent=5 // pred_check
        _
      $region34: #{tpu_custom_call.1} parent=5 // pred_check_branch
        %225 = sbr.rel (%p222) target = $region36
      $region35: #{tpu_custom_call.1} parent=5 // pred_region
        %s226 = ssub.s32 %s16, 1
        // Predicated region
        $region37: #{tpu_custom_call.1} parent=35 // pred_check
          %p227 = pneg %p70
        $region38: #{tpu_custom_call.1} parent=35 // pred_check_branch
          %229 = sbr.rel (%p227) target = $region40
        $region39: #{tpu_custom_call.1} parent=35 // pred_region
          %231 = dma.done [#allocation6], 1792
        $region40: #{tpu_custom_call.1} parent=35 // pred_fallthru
          _
        // Predicated region
        $region41: #{tpu_custom_call.1} parent=35 // pred_check
          %p232 = pneg %p91
        $region42: #{tpu_custom_call.1} parent=35 // pred_check_branch
          %234 = sbr.rel (%p232) target = $region44
        $region43: #{tpu_custom_call.1} parent=35 // pred_region
          %236 = dma.done [#allocation9], 896
        $region44: #{tpu_custom_call.1} parent=35 // pred_fallthru
          _
        %s237 = sand.u32 %s21, 1
        %s238 = scalar_lea.sflag [#allocation6], %s237
        %s239 = sand.u32 %s106, 1
        %s240 = smul.addr %s239, 32
        %s241 = scalar_lea.vmem [#allocation10], %s240
        // Predicated region
        $region45: #{tpu_custom_call.1} parent=35 // pred_check
          %p242 = pneg %p119
        $region46: #{tpu_custom_call.1} parent=35 // pred_check_branch
          %244 = sbr.rel (%p242) target = $region48
        $region47: #{tpu_custom_call.1} parent=35 // pred_region
          %246 = dma.done %s238, 512
        $region48: #{tpu_custom_call.1} parent=35 // pred_fallthru
          _
        %p247 = pneg %p49
        %p248 = pneg %p46
        %p249 = pneg %p70
        %p250 = pneg %p67
        %p251 = pneg %p91
        %p252 = pneg %p88
        %s253 = sand.u32 %s21, 1
        %s254 = scalar_lea.sflag [#allocation6], %s253
        %s255 = sand.u32 %s106, 1
        %s256 = smul.addr %s255, 32
        %s257 = scalar_lea.vmem [#allocation10], %s256
        %p258 = pneg %p119
        %p259 = pneg %p116
        %p260 = pneg %p145
        %p261 = pneg %p142
        %s262 = sand.u32 %s132, 1
        %s263 = scalar_lea.sflag [#allocation7], %s262
        %s264 = sand.u32 %s132, 1
        %s265 = smul.addr %s264, 16
        %s266 = scalar_lea.vmem [#allocation11], %s265
        %s267 = smul.u32 4, %s26
        %p269 = scmp.eq.s32.totalorder %s26, 0
        // Predicated region
        $region49: #{tpu_custom_call.1} parent=35 // pred_check
          %p270 = pneg %p269
        $region50: #{tpu_custom_call.1} parent=35 // pred_check_branch
          %272 = sbr.rel (%p270) target = $region52
        $region51: #{tpu_custom_call.1} parent=35 // pred_region
          %vm273 = vcmask 130048
          %274 = vst.msk [vmem:[#allocation2] sm:$0xff] %vm273, 0.0
          %275 = vst.msk [vmem:[#allocation2 + $0x8] sm:$0xff] %vm273, 0.0
          %276 = vst.msk [vmem:[#allocation3] sm:$0xff] %vm273, -inf
          %277 = vst.msk [vmem:[#allocation3 + $0x8] sm:$0xff] %vm273, -inf
        $region52: #{tpu_custom_call.1} parent=35 // pred_fallthru
          _
        %v278 = vld [vmem:[%s241] sm:$0xf]
        %v279 = vld [vmem:[%s241 + $0x4] sm:$0xf]
        %v280 = vld [vmem:[%s241 + $0x8] sm:$0xf]
        %v281 = vld [vmem:[%s241 + $0xc] sm:$0xf]
        %v282 = vld [vmem:[%s241 + $0x10] sm:$0xf]
        %v283 = vld [vmem:[%s241 + $0x14] sm:$0xf]
        %v284 = vld [vmem:[%s241 + $0x18] sm:$0xf]
        %v285 = vld [vmem:[%s241 + $0x1c] sm:$0xf]
        %v286 = vunpack.c.l.bf16 %v278
        %v287 = vunpack.c.l.bf16 %v279
        %v288 = vunpack.c.l.bf16 %v280
        %v289 = vunpack.c.l.bf16 %v281
        %v290 = vunpack.c.l.bf16 %v282
        %v291 = vunpack.c.l.bf16 %v283
        %v292 = vunpack.c.l.bf16 %v284
        %v293 = vunpack.c.l.bf16 %v285
        %v294 = vld [vmem:[#allocation2] sm:$0xff]
        %v295 = vld [vmem:[#allocation2 + $0x8] sm:$0xff]
        %vm296 = vcmask 130048
        %v297 = vsel %vm296, %v286, 0.0
        %v298 = vsel %vm296, %v288, 0.0
        %v299 = vadd.f32 %v297, %v298
        %v300 = vsel %vm296, %v290, 0.0
        %v301 = vadd.f32 %v299, %v300
        %v302 = vsel %vm296, %v292, 0.0
        %v303 = vadd.f32 %v301, %v302
        %v304 = vsel %vm296, %v287, 0.0
        %v305 = vsel %vm296, %v289, 0.0
        %v306 = vadd.f32 %v304, %v305
        %v307 = vsel %vm296, %v291, 0.0
        %v308 = vadd.f32 %v306, %v307
        %v309 = vsel %vm296, %v293, 0.0
        %v310 = vadd.f32 %v308, %v309
        %v311 = vadd.f32 %v294, %v303
        %v312 = vadd.f32 %v295, %v310
        %313 = vst.msk [vmem:[#allocation2] sm:$0xff] %vm296, %v311
        %314 = vst.msk [vmem:[#allocation2 + $0x8] sm:$0xff] %vm296, %v312
        %v315 = vld [vmem:[#allocation3] sm:$0xff]
        %v316 = vld [vmem:[#allocation3 + $0x8] sm:$0xff]
        %v317 = vsel %vm296, %v286, -inf
        %v318 = vsel %vm296, %v288, -inf
        %v319 = vsel %vm296, %v290, -inf
        %v320 = vmax.f32 %v317, %v319
        %v321 = vsel %vm296, %v292, -inf
        %v322 = vmax.f32 %v318, %v321
        %v323 = vmax.f32 %v320, %v322
        %v324 = vsel %vm296, %v287, -inf
        %v325 = vsel %vm296, %v289, -inf
        %v326 = vsel %vm296, %v291, -inf
        %v327 = vmax.f32 %v324, %v326
        %v328 = vsel %vm296, %v293, -inf
        %v329 = vmax.f32 %v325, %v328
        %v330 = vmax.f32 %v327, %v329
        %v331 = vmax.f32 %v315, %v323
        %v332 = vmax.f32 %v316, %v330
        %333 = vst.msk [vmem:[#allocation3] sm:$0xff] %vm296, %v331
        %334 = vst.msk [vmem:[#allocation3 + $0x8] sm:$0xff] %vm296, %v332
        // Predicated region
        $region53: #{tpu_custom_call.1} parent=35 // pred_check
          %p335 = pneg %p269
        $region54: #{tpu_custom_call.1} parent=35 // pred_check_branch
          %337 = sbr.rel (%p335) target = $region56
        $region55: #{tpu_custom_call.1} parent=35 // pred_region
          %s338 = sld [smem:[#allocation4]]
          %v339 = vld [vmem:[#allocation2] sm:$0xff]
          %v340 = vld [vmem:[#allocation2 + $0x8] sm:$0xff]
          %v341 = vpack.c.bf16 %v340, %v339
          %v342 = vld [vmem:[#allocation3] sm:$0xff]
          %v343 = vld [vmem:[#allocation3 + $0x8] sm:$0xff]
          %v344 = vpack.c.bf16 %v343, %v342
          %345 = vst.msk [vmem:[%s266] sm:$0xff] %vm296, 0.0
          %346 = vst.msk [vmem:[%s266 + $0x8] sm:$0xff] %vm296, 0.0
          %v347 = vld [vmem:[#allocation5] sm:$0xf]
          %v348 = vld [vmem:[#allocation5 + $0x4] sm:$0xf]
          %s349 = scalar_lea.vmem [#allocation5], 8
          %v350 = vld [vmem:[%s349] sm:$0xf]
          %v351 = vld [vmem:[%s349 + $0x4] sm:$0xf]
          %v354 = vunpack.c.l.b16 %v350
          %v355 = vunpack.c.l.b16 %v351
          %v356 = vpack.c.b16 %v355, %v354
          %v359 = vsel %vm296, %v344, 0
          %361 = vmatpush.bf16.msra.mxu0 0
          %362 = vmatpush.bf16.msra.mxu0 0
          %363 = vmatpush.bf16.msra.mxu0 0
          %364 = vmatpush.bf16.msra.mxu0 0
          %365 = vmatpush.bf16.msra.mxu0 0
          %366 = vmatpush.bf16.msra.mxu0 0
          %367 = vmatpush.bf16.msra.mxu0 0
          %368 = vmatpush.bf16.msra.mxu0 %v356
          %369 = vmatmul.bf16.gmra.mxu0 %v359
          %v370 = vpop.f32.mrf.mxu0
          %v371 = vadd.f32 0.0, %v370
          %v372 = vpop.f32.mrf.mxu0
          %v373 = vadd.f32 0.0, %v372
          %374 = vdwg.mxu0
          %v377 = vunpack.c.l.b16 %v347
          %v378 = vunpack.c.l.b16 %v348
          %v379 = vpack.c.b16 %v378, %v377
          %v382 = vsel %vm296, %v341, 0
          %384 = vmatpush.bf16.msra.mxu0 0
          %385 = vmatpush.bf16.msra.mxu0 0
          %386 = vmatpush.bf16.msra.mxu0 0
          %387 = vmatpush.bf16.msra.mxu0 0
          %388 = vmatpush.bf16.msra.mxu0 0
          %389 = vmatpush.bf16.msra.mxu0 0
          %390 = vmatpush.bf16.msra.mxu0 0
          %391 = vmatpush.bf16.msra.mxu0 %v379
          %392 = vmatmul.bf16.gmra.mxu0 %v382
          %v393 = vpop.f32.mrf.mxu0
          %v394 = vadd.f32 %v371, %v393
          %v395 = vpop.f32.mrf.mxu0
          %v396 = vadd.f32 %v373, %v395
          %397 = vdwg.mxu0
          %v398 = vld [vmem:[%s266] sm:$0xff]
          %v399 = vld [vmem:[%s266 + $0x8] sm:$0xff]
          %v400 = vld [vmem:[#allocation8] sm:$0xf]
          %v401 = vld [vmem:[#allocation8 + $0x4] sm:$0xf]
          %v402 = vpack.c.bf16 %v396, %v394
          %v405 = vunpack.c.l.b16 %v400
          %v406 = vunpack.c.l.b16 %v401
          %v407 = vpack.c.b16 %v406, %v405
          %v409 = vsel %vm296, %v407, 0
          %411 = vmatpush.bf16.msra.mxu0 0
          %412 = vmatpush.bf16.msra.mxu0 0
          %413 = vmatpush.bf16.msra.mxu0 0
          %414 = vmatpush.bf16.msra.mxu0 0
          %415 = vmatpush.bf16.msra.mxu0 0
          %416 = vmatpush.bf16.msra.mxu0 0
          %417 = vmatpush.bf16.msra.mxu0 0
          %418 = vmatpush.bf16.msra.mxu0 %v402
          %419 = vmatmul.bf16.gmra.mxu0 %v409
          %v420 = vpop.f32.mrf.mxu0
          %v421 = vadd.f32 0.0, %v420
          %v422 = vpop.f32.mrf.mxu0
          %v423 = vadd.f32 0.0, %v422
          %424 = vdwg.mxu0
          %v425 = vadd.f32 %v398, %v421
          %v426 = vadd.f32 %v399, %v423
          %427 = vst.msk [vmem:[%s266] sm:$0xff] %vm296, %v425
          %428 = vst.msk [vmem:[%s266 + $0x8] sm:$0xff] %vm296, %v426
          %s429 = scalar_lea.vmem [#allocation5], 16
          %v430 = vld [vmem:[%s429] sm:$0xf]
          %v431 = vld [vmem:[%s429 + $0x4] sm:$0xf]
          %s432 = scalar_lea.vmem [#allocation5], 24
          %v433 = vld [vmem:[%s432] sm:$0xf]
          %v434 = vld [vmem:[%s432 + $0x4] sm:$0xf]
          %v437 = vunpack.c.l.b16 %v433
          %v438 = vunpack.c.l.b16 %v434
          %v439 = vpack.c.b16 %v438, %v437
          %441 = vmatpush.bf16.msra.mxu0 0
          %442 = vmatpush.bf16.msra.mxu0 0
          %443 = vmatpush.bf16.msra.mxu0 0
          %444 = vmatpush.bf16.msra.mxu0 0
          %445 = vmatpush.bf16.msra.mxu0 0
          %446 = vmatpush.bf16.msra.mxu0 0
          %447 = vmatpush.bf16.msra.mxu0 0
          %448 = vmatpush.bf16.msra.mxu0 %v439
          %449 = vmatmul.bf16.gmra.mxu0 %v359
          %v450 = vpop.f32.mrf.mxu0
          %v451 = vadd.f32 0.0, %v450
          %v452 = vpop.f32.mrf.mxu0
          %v453 = vadd.f32 0.0, %v452
          %454 = vdwg.mxu0
          %v457 = vunpack.c.l.b16 %v430
          %v458 = vunpack.c.l.b16 %v431
          %v459 = vpack.c.b16 %v458, %v457
          %461 = vmatpush.bf16.msra.mxu0 0
          %462 = vmatpush.bf16.msra.mxu0 0
          %463 = vmatpush.bf16.msra.mxu0 0
          %464 = vmatpush.bf16.msra.mxu0 0
          %465 = vmatpush.bf16.msra.mxu0 0
          %466 = vmatpush.bf16.msra.mxu0 0
          %467 = vmatpush.bf16.msra.mxu0 0
          %468 = vmatpush.bf16.msra.mxu0 %v459
          %469 = vmatmul.bf16.gmra.mxu0 %v382
          %v470 = vpop.f32.mrf.mxu0
          %v471 = vadd.f32 %v451, %v470
          %v472 = vpop.f32.mrf.mxu0
          %v473 = vadd.f32 %v453, %v472
          %474 = vdwg.mxu0
          %v475 = vld [vmem:[%s266] sm:$0xff]
          %v476 = vld [vmem:[%s266 + $0x8] sm:$0xff]
          %s477 = scalar_lea.vmem [#allocation8], 8
          %v478 = vld [vmem:[%s477] sm:$0xf]
          %v479 = vld [vmem:[%s477 + $0x4] sm:$0xf]
          %v480 = vpack.c.bf16 %v473, %v471
          %v483 = vunpack.c.l.b16 %v478
          %v484 = vunpack.c.l.b16 %v479
          %v485 = vpack.c.b16 %v484, %v483
          %v487 = vsel %vm296, %v485, 0
          %489 = vmatpush.bf16.msra.mxu0 0
          %490 = vmatpush.bf16.msra.mxu0 0
          %491 = vmatpush.bf16.msra.mxu0 0
          %492 = vmatpush.bf16.msra.mxu0 0
          %493 = vmatpush.bf16.msra.mxu0 0
          %494 = vmatpush.bf16.msra.mxu0 0
          %495 = vmatpush.bf16.msra.mxu0 0
          %496 = vmatpush.bf16.msra.mxu0 %v480
          %497 = vmatmul.bf16.gmra.mxu0 %v487
          %v498 = vpop.f32.mrf.mxu0
          %v499 = vadd.f32 0.0, %v498
          %v500 = vpop.f32.mrf.mxu0
          %v501 = vadd.f32 0.0, %v500
          %502 = vdwg.mxu0
          %v503 = vadd.f32 %v475, %v499
          %v504 = vadd.f32 %v476, %v501
          %505 = vst.msk [vmem:[%s266] sm:$0xff] %vm296, %v503
          %506 = vst.msk [vmem:[%s266 + $0x8] sm:$0xff] %vm296, %v504
          %s507 = scalar_lea.vmem [#allocation5], 32
          %v508 = vld [vmem:[%s507] sm:$0xf]
          %v509 = vld [vmem:[%s507 + $0x4] sm:$0xf]
          %s510 = scalar_lea.vmem [#allocation5], 40
          %v511 = vld [vmem:[%s510] sm:$0xf]
          %v512 = vld [vmem:[%s510 + $0x4] sm:$0xf]
          %v515 = vunpack.c.l.b16 %v511
          %v516 = vunpack.c.l.b16 %v512
          %v517 = vpack.c.b16 %v516, %v515
          %519 = vmatpush.bf16.msra.mxu0 0
          %520 = vmatpush.bf16.msra.mxu0 0
          %521 = vmatpush.bf16.msra.mxu0 0
          %522 = vmatpush.bf16.msra.mxu0 0
          %523 = vmatpush.bf16.msra.mxu0 0
          %524 = vmatpush.bf16.msra.mxu0 0
          %525 = vmatpush.bf16.msra.mxu0 0
          %526 = vmatpush.bf16.msra.mxu0 %v517
          %527 = vmatmul.bf16.gmra.mxu0 %v359
          %v528 = vpop.f32.mrf.mxu0
          %v529 = vadd.f32 0.0, %v528
          %v530 = vpop.f32.mrf.mxu0
          %v531 = vadd.f32 0.0, %v530
          %532 = vdwg.mxu0
          %v535 = vunpack.c.l.b16 %v508
          %v536 = vunpack.c.l.b16 %v509
          %v537 = vpack.c.b16 %v536, %v535
          %539 = vmatpush.bf16.msra.mxu0 0
          %540 = vmatpush.bf16.msra.mxu0 0
          %541 = vmatpush.bf16.msra.mxu0 0
          %542 = vmatpush.bf16.msra.mxu0 0
          %543 = vmatpush.bf16.msra.mxu0 0
          %544 = vmatpush.bf16.msra.mxu0 0
          %545 = vmatpush.bf16.msra.mxu0 0
          %546 = vmatpush.bf16.msra.mxu0 %v537
          %547 = vmatmul.bf16.gmra.mxu0 %v382
          %v548 = vpop.f32.mrf.mxu0
          %v549 = vadd.f32 %v529, %v548
          %v550 = vpop.f32.mrf.mxu0
          %v551 = vadd.f32 %v531, %v550
          %552 = vdwg.mxu0
          %v553 = vld [vmem:[%s266] sm:$0xff]
          %v554 = vld [vmem:[%s266 + $0x8] sm:$0xff]
          %s555 = scalar_lea.vmem [#allocation8], 16
          %v556 = vld [vmem:[%s555] sm:$0xf]
          %v557 = vld [vmem:[%s555 + $0x4] sm:$0xf]
          %v558 = vpack.c.bf16 %v551, %v549
          %v561 = vunpack.c.l.b16 %v556
          %v562 = vunpack.c.l.b16 %v557
          %v563 = vpack.c.b16 %v562, %v561
          %v565 = vsel %vm296, %v563, 0
          %567 = vmatpush.bf16.msra.mxu0 0
          %568 = vmatpush.bf16.msra.mxu0 0
          %569 = vmatpush.bf16.msra.mxu0 0
          %570 = vmatpush.bf16.msra.mxu0 0
          %571 = vmatpush.bf16.msra.mxu0 0
          %572 = vmatpush.bf16.msra.mxu0 0
          %573 = vmatpush.bf16.msra.mxu0 0
          %574 = vmatpush.bf16.msra.mxu0 %v558
          %575 = vmatmul.bf16.gmra.mxu0 %v565
          %v576 = vpop.f32.mrf.mxu0
          %v577 = vadd.f32 0.0, %v576
          %v578 = vpop.f32.mrf.mxu0
          %v579 = vadd.f32 0.0, %v578
          %580 = vdwg.mxu0
          %v581 = vadd.f32 %v553, %v577
          %v582 = vadd.f32 %v554, %v579
          %583 = vst.msk [vmem:[%s266] sm:$0xff] %vm296, %v581
          %584 = vst.msk [vmem:[%s266 + $0x8] sm:$0xff] %vm296, %v582
          %s585 = scalar_lea.vmem [#allocation5], 48
          %v586 = vld [vmem:[%s585] sm:$0xf]
          %v587 = vld [vmem:[%s585 + $0x4] sm:$0xf]
          %s588 = scalar_lea.vmem [#allocation5], 56
          %v589 = vld [vmem:[%s588] sm:$0xf]
          %v590 = vld [vmem:[%s588 + $0x4] sm:$0xf]
          %v593 = vunpack.c.l.b16 %v589
          %v594 = vunpack.c.l.b16 %v590
          %v595 = vpack.c.b16 %v594, %v593
          %597 = vmatpush.bf16.msra.mxu0 0
          %598 = vmatpush.bf16.msra.mxu0 0
          %599 = vmatpush.bf16.msra.mxu0 0
          %600 = vmatpush.bf16.msra.mxu0 0
          %601 = vmatpush.bf16.msra.mxu0 0
          %602 = vmatpush.bf16.msra.mxu0 0
          %603 = vmatpush.bf16.msra.mxu0 0
          %604 = vmatpush.bf16.msra.mxu0 %v595
          %605 = vmatmul.bf16.gmra.mxu0 %v359
          %v606 = vpop.f32.mrf.mxu0
          %v607 = vadd.f32 0.0, %v606
          %v608 = vpop.f32.mrf.mxu0
          %v609 = vadd.f32 0.0, %v608
          %610 = vdwg.mxu0
          %v613 = vunpack.c.l.b16 %v586
          %v614 = vunpack.c.l.b16 %v587
          %v615 = vpack.c.b16 %v614, %v613
          %617 = vmatpush.bf16.msra.mxu0 0
          %618 = vmatpush.bf16.msra.mxu0 0
          %619 = vmatpush.bf16.msra.mxu0 0
          %620 = vmatpush.bf16.msra.mxu0 0
          %621 = vmatpush.bf16.msra.mxu0 0
          %622 = vmatpush.bf16.msra.mxu0 0
          %623 = vmatpush.bf16.msra.mxu0 0
          %624 = vmatpush.bf16.msra.mxu0 %v615
          %625 = vmatmul.bf16.gmra.mxu0 %v382
          %v626 = vpop.f32.mrf.mxu0
          %v627 = vadd.f32 %v607, %v626
          %v628 = vpop.f32.mrf.mxu0
          %v629 = vadd.f32 %v609, %v628
          %630 = vdwg.mxu0
          %v631 = vld [vmem:[%s266] sm:$0xff]
          %v632 = vld [vmem:[%s266 + $0x8] sm:$0xff]
          %s633 = scalar_lea.vmem [#allocation8], 24
          %v634 = vld [vmem:[%s633] sm:$0xf]
          %v635 = vld [vmem:[%s633 + $0x4] sm:$0xf]
          %v636 = vpack.c.bf16 %v629, %v627
          %v639 = vunpack.c.l.b16 %v634
          %v640 = vunpack.c.l.b16 %v635
          %v641 = vpack.c.b16 %v640, %v639
          %v643 = vsel %vm296, %v641, 0
          %645 = vmatpush.bf16.msra.mxu0 0
          %646 = vmatpush.bf16.msra.mxu0 0
          %647 = vmatpush.bf16.msra.mxu0 0
          %648 = vmatpush.bf16.msra.mxu0 0
          %649 = vmatpush.bf16.msra.mxu0 0
          %650 = vmatpush.bf16.msra.mxu0 0
          %651 = vmatpush.bf16.msra.mxu0 0
          %652 = vmatpush.bf16.msra.mxu0 %v636
          %653 = vmatmul.bf16.gmra.mxu0 %v643
          %v654 = vpop.f32.mrf.mxu0
          %v655 = vadd.f32 0.0, %v654
          %v656 = vpop.f32.mrf.mxu0
          %v657 = vadd.f32 0.0, %v656
          %658 = vdwg.mxu0
          %v659 = vadd.f32 %v631, %v655
          %v660 = vadd.f32 %v632, %v657
          %661 = vst.msk [vmem:[%s266] sm:$0xff] %vm296, %v659
          %662 = vst.msk [vmem:[%s266 + $0x8] sm:$0xff] %vm296, %v660
          %s663 = scalar_lea.vmem [#allocation5], 64
          %v664 = vld [vmem:[%s663] sm:$0xf]
          %v665 = vld [vmem:[%s663 + $0x4] sm:$0xf]
          %s666 = scalar_lea.vmem [#allocation5], 72
          %v667 = vld [vmem:[%s666] sm:$0xf]
          %v668 = vld [vmem:[%s666 + $0x4] sm:$0xf]
          %v671 = vunpack.c.l.b16 %v667
          %v672 = vunpack.c.l.b16 %v668
          %v673 = vpack.c.b16 %v672, %v671
          %675 = vmatpush.bf16.msra.mxu0 0
          %676 = vmatpush.bf16.msra.mxu0 0
          %677 = vmatpush.bf16.msra.mxu0 0
          %678 = vmatpush.bf16.msra.mxu0 0
          %679 = vmatpush.bf16.msra.mxu0 0
          %680 = vmatpush.bf16.msra.mxu0 0
          %681 = vmatpush.bf16.msra.mxu0 0
          %682 = vmatpush.bf16.msra.mxu0 %v673
          %683 = vmatmul.bf16.gmra.mxu0 %v359
          %v684 = vpop.f32.mrf.mxu0
          %v685 = vadd.f32 0.0, %v684
          %v686 = vpop.f32.mrf.mxu0
          %v687 = vadd.f32 0.0, %v686
          %688 = vdwg.mxu0
          %v691 = vunpack.c.l.b16 %v664
          %v692 = vunpack.c.l.b16 %v665
          %v693 = vpack.c.b16 %v692, %v691
          %695 = vmatpush.bf16.msra.mxu0 0
          %696 = vmatpush.bf16.msra.mxu0 0
          %697 = vmatpush.bf16.msra.mxu0 0
          %698 = vmatpush.bf16.msra.mxu0 0
          %699 = vmatpush.bf16.msra.mxu0 0
          %700 = vmatpush.bf16.msra.mxu0 0
          %701 = vmatpush.bf16.msra.mxu0 0
          %702 = vmatpush.bf16.msra.mxu0 %v693
          %703 = vmatmul.bf16.gmra.mxu0 %v382
          %v704 = vpop.f32.mrf.mxu0
          %v705 = vadd.f32 %v685, %v704
          %v706 = vpop.f32.mrf.mxu0
          %v707 = vadd.f32 %v687, %v706
          %708 = vdwg.mxu0
          %v709 = vld [vmem:[%s266] sm:$0xff]
          %v710 = vld [vmem:[%s266 + $0x8] sm:$0xff]
          %s711 = scalar_lea.vmem [#allocation8], 32
          %v712 = vld [vmem:[%s711] sm:$0xf]
          %v713 = vld [vmem:[%s711 + $0x4] sm:$0xf]
          %v714 = vpack.c.bf16 %v707, %v705
          %v717 = vunpack.c.l.b16 %v712
          %v718 = vunpack.c.l.b16 %v713
          %v719 = vpack.c.b16 %v718, %v717
          %v721 = vsel %vm296, %v719, 0
          %723 = vmatpush.bf16.msra.mxu0 0
          %724 = vmatpush.bf16.msra.mxu0 0
          %725 = vmatpush.bf16.msra.mxu0 0
          %726 = vmatpush.bf16.msra.mxu0 0
          %727 = vmatpush.bf16.msra.mxu0 0
          %728 = vmatpush.bf16.msra.mxu0 0
          %729 = vmatpush.bf16.msra.mxu0 0
          %730 = vmatpush.bf16.msra.mxu0 %v714
          %731 = vmatmul.bf16.gmra.mxu0 %v721
          %v732 = vpop.f32.mrf.mxu0
          %v733 = vadd.f32 0.0, %v732
          %v734 = vpop.f32.mrf.mxu0
          %v735 = vadd.f32 0.0, %v734
          %736 = vdwg.mxu0
          %v737 = vadd.f32 %v709, %v733
          %v738 = vadd.f32 %v710, %v735
          %739 = vst.msk [vmem:[%s266] sm:$0xff] %vm296, %v737
          %740 = vst.msk [vmem:[%s266 + $0x8] sm:$0xff] %vm296, %v738
          %s741 = scalar_lea.vmem [#allocation5], 80
          %v742 = vld [vmem:[%s741] sm:$0xf]
          %v743 = vld [vmem:[%s741 + $0x4] sm:$0xf]
          %s744 = scalar_lea.vmem [#allocation5], 88
          %v745 = vld [vmem:[%s744] sm:$0xf]
          %v746 = vld [vmem:[%s744 + $0x4] sm:$0xf]
          %v749 = vunpack.c.l.b16 %v745
          %v750 = vunpack.c.l.b16 %v746
          %v751 = vpack.c.b16 %v750, %v749
          %753 = vmatpush.bf16.msra.mxu0 0
          %754 = vmatpush.bf16.msra.mxu0 0
          %755 = vmatpush.bf16.msra.mxu0 0
          %756 = vmatpush.bf16.msra.mxu0 0
          %757 = vmatpush.bf16.msra.mxu0 0
          %758 = vmatpush.bf16.msra.mxu0 0
          %759 = vmatpush.bf16.msra.mxu0 0
          %760 = vmatpush.bf16.msra.mxu0 %v751
          %761 = vmatmul.bf16.gmra.mxu0 %v359
          %v762 = vpop.f32.mrf.mxu0
          %v763 = vadd.f32 0.0, %v762
          %v764 = vpop.f32.mrf.mxu0
          %v765 = vadd.f32 0.0, %v764
          %766 = vdwg.mxu0
          %v769 = vunpack.c.l.b16 %v742
          %v770 = vunpack.c.l.b16 %v743
          %v771 = vpack.c.b16 %v770, %v769
          %773 = vmatpush.bf16.msra.mxu0 0
          %774 = vmatpush.bf16.msra.mxu0 0
          %775 = vmatpush.bf16.msra.mxu0 0
          %776 = vmatpush.bf16.msra.mxu0 0
          %777 = vmatpush.bf16.msra.mxu0 0
          %778 = vmatpush.bf16.msra.mxu0 0
          %779 = vmatpush.bf16.msra.mxu0 0
          %780 = vmatpush.bf16.msra.mxu0 %v771
          %781 = vmatmul.bf16.gmra.mxu0 %v382
          %v782 = vpop.f32.mrf.mxu0
          %v783 = vadd.f32 %v763, %v782
          %v784 = vpop.f32.mrf.mxu0
          %v785 = vadd.f32 %v765, %v784
          %786 = vdwg.mxu0
          %v787 = vld [vmem:[%s266] sm:$0xff]
          %v788 = vld [vmem:[%s266 + $0x8] sm:$0xff]
          %s789 = scalar_lea.vmem [#allocation8], 40
          %v790 = vld [vmem:[%s789] sm:$0xf]
          %v791 = vld [vmem:[%s789 + $0x4] sm:$0xf]
          %v792 = vpack.c.bf16 %v785, %v783
          %v795 = vunpack.c.l.b16 %v790
          %v796 = vunpack.c.l.b16 %v791
          %v797 = vpack.c.b16 %v796, %v795
          %v799 = vsel %vm296, %v797, 0
          %801 = vmatpush.bf16.msra.mxu0 0
          %802 = vmatpush.bf16.msra.mxu0 0
          %803 = vmatpush.bf16.msra.mxu0 0
          %804 = vmatpush.bf16.msra.mxu0 0
          %805 = vmatpush.bf16.msra.mxu0 0
          %806 = vmatpush.bf16.msra.mxu0 0
          %807 = vmatpush.bf16.msra.mxu0 0
          %808 = vmatpush.bf16.msra.mxu0 %v792
          %809 = vmatmul.bf16.gmra.mxu0 %v799
          %v810 = vpop.f32.mrf.mxu0
          %v811 = vadd.f32 0.0, %v810
          %v812 = vpop.f32.mrf.mxu0
          %v813 = vadd.f32 0.0, %v812
          %814 = vdwg.mxu0
          %v815 = vadd.f32 %v787, %v811
          %v816 = vadd.f32 %v788, %v813
          %817 = vst.msk [vmem:[%s266] sm:$0xff] %vm296, %v815
          %818 = vst.msk [vmem:[%s266 + $0x8] sm:$0xff] %vm296, %v816
          %s819 = scalar_lea.vmem [#allocation5], 96
          %v820 = vld [vmem:[%s819] sm:$0xf]
          %v821 = vld [vmem:[%s819 + $0x4] sm:$0xf]
          %s822 = scalar_lea.vmem [#allocation5], 104
          %v823 = vld [vmem:[%s822] sm:$0xf]
          %v824 = vld [vmem:[%s822 + $0x4] sm:$0xf]
          %v827 = vunpack.c.l.b16 %v823
          %v828 = vunpack.c.l.b16 %v824
          %v829 = vpack.c.b16 %v828, %v827
          %831 = vmatpush.bf16.msra.mxu0 0
          %832 = vmatpush.bf16.msra.mxu0 0
          %833 = vmatpush.bf16.msra.mxu0 0
          %834 = vmatpush.bf16.msra.mxu0 0
          %835 = vmatpush.bf16.msra.mxu0 0
          %836 = vmatpush.bf16.msra.mxu0 0
          %837 = vmatpush.bf16.msra.mxu0 0
          %838 = vmatpush.bf16.msra.mxu0 %v829
          %839 = vmatmul.bf16.gmra.mxu0 %v359
          %v840 = vpop.f32.mrf.mxu0
          %v841 = vadd.f32 0.0, %v840
          %v842 = vpop.f32.mrf.mxu0
          %v843 = vadd.f32 0.0, %v842
          %844 = vdwg.mxu0
          %v847 = vunpack.c.l.b16 %v820
          %v848 = vunpack.c.l.b16 %v821
          %v849 = vpack.c.b16 %v848, %v847
          %851 = vmatpush.bf16.msra.mxu0 0
          %852 = vmatpush.bf16.msra.mxu0 0
          %853 = vmatpush.bf16.msra.mxu0 0
          %854 = vmatpush.bf16.msra.mxu0 0
          %855 = vmatpush.bf16.msra.mxu0 0
          %856 = vmatpush.bf16.msra.mxu0 0
          %857 = vmatpush.bf16.msra.mxu0 0
          %858 = vmatpush.bf16.msra.mxu0 %v849
          %859 = vmatmul.bf16.gmra.mxu0 %v382
          %v860 = vpop.f32.mrf.mxu0
          %v861 = vadd.f32 %v841, %v860
          %v862 = vpop.f32.mrf.mxu0
          %v863 = vadd.f32 %v843, %v862
          %864 = vdwg.mxu0
          %v865 = vld [vmem:[%s266] sm:$0xff]
          %v866 = vld [vmem:[%s266 + $0x8] sm:$0xff]
          %s867 = scalar_lea.vmem [#allocation8], 48
          %v868 = vld [vmem:[%s867] sm:$0xf]
          %v869 = vld [vmem:[%s867 + $0x4] sm:$0xf]
          %v870 = vpack.c.bf16 %v863, %v861
          %v873 = vunpack.c.l.b16 %v868
          %v874 = vunpack.c.l.b16 %v869
          %v875 = vpack.c.b16 %v874, %v873
          %v877 = vsel %vm296, %v875, 0
          %879 = vmatpush.bf16.msra.mxu0 0
          %880 = vmatpush.bf16.msra.mxu0 0
          %881 = vmatpush.bf16.msra.mxu0 0
          %882 = vmatpush.bf16.msra.mxu0 0
          %883 = vmatpush.bf16.msra.mxu0 0
          %884 = vmatpush.bf16.msra.mxu0 0
          %885 = vmatpush.bf16.msra.mxu0 0
          %886 = vmatpush.bf16.msra.mxu0 %v870
          %887 = vmatmul.bf16.gmra.mxu0 %v877
          %v888 = vpop.f32.mrf.mxu0
          %v889 = vadd.f32 0.0, %v888
          %v890 = vpop.f32.mrf.mxu0
          %v891 = vadd.f32 0.0, %v890
          %892 = vdwg.mxu0
          %v893 = vadd.f32 %v865, %v889
          %v894 = vadd.f32 %v866, %v891
          %895 = vst.msk [vmem:[%s266] sm:$0xff] %vm296, %v893
          %896 = vst.msk [vmem:[%s266 + $0x8] sm:$0xff] %vm296, %v894
          %v897 = vld [vmem:[%s266] sm:$0xff]
          %v898 = vld [vmem:[%s266 + $0x8] sm:$0xff]
          %v899 = vstv %s338
          %v900 = vadd.f32 %v897, %v899
          %v901 = vadd.f32 %v898, %v899
          %v902 = vxor.u32 %v900, 2147483648
          %v903 = vxor.u32 %v901, 2147483648
          %v904 = vmul.f32 %v902, 1.442695
          %v905 = vpow.pop %v904
          %v906 = vmul.f32 %v903, 1.442695
          %v907 = vpow.pop %v906
          %v908 = vadd.f32 %v905, 1.0
          %v909 = vadd.f32 %v907, 1.0
          %v910 = vrcp.pop %v908
          %v911 = vmul.f32 %v908, %v910
          %v912 = vsub.f32 1.0, %v911
          %v913 = vmul.f32 %v910, %v912
          %v914 = vadd.f32 %v910, %v913
          %vm915 = vweird.f32 %v908
          %vm916 = vweird.f32 %v910
          %vm917 = vmor %vm915, %vm916
          %v918 = vsel %vm917, %v910, %v914
          %v919 = vand.u32 2147483647, %v908
          %vm920 = vcmp.eq.f32.partialorder %v919, 8.507059e+37
          %v921 = vand.u32 %v908, 2147483648
          %v922 = vor.u32 1.1754944e-38, %v921
          %v923 = vsel %vm920, %v922, %v918
          %v924 = vmul.f32 1.0, %v923
          %v925 = vrcp.pop %v909
          %v926 = vmul.f32 %v909, %v925
          %v927 = vsub.f32 1.0, %v926
          %v928 = vmul.f32 %v925, %v927
          %v929 = vadd.f32 %v925, %v928
          %vm930 = vweird.f32 %v909
          %vm931 = vweird.f32 %v925
          %vm932 = vmor %vm930, %vm931
          %v933 = vsel %vm932, %v925, %v929
          %v934 = vand.u32 2147483647, %v909
          %vm935 = vcmp.eq.f32.partialorder %v934, 8.507059e+37
          %v936 = vand.u32 %v909, 2147483648
          %v937 = vor.u32 1.1754944e-38, %v936
          %v938 = vsel %vm935, %v937, %v933
          %v939 = vmul.f32 1.0, %v938
          %940 = vst.msk [vmem:[%s266] sm:$0xff] %vm296, %v924
          %941 = vst.msk [vmem:[%s266 + $0x8] sm:$0xff] %vm296, %v939
        $region56: #{tpu_custom_call.1} parent=35 // pred_fallthru
          _
        %s942 = sand.u32 %s132, 1
        %s943 = scalar_lea.sflag [#allocation7], %s942
        %s944 = sand.u32 %s132, 1
        %s945 = smul.addr %s944, 16
        %s946 = scalar_lea.vmem [#allocation11], %s945
        // Predicated region
        $region57: #{tpu_custom_call.1} parent=35 // pred_check
          %p947 = pneg %p142
        $region58: #{tpu_custom_call.1} parent=35 // pred_check_branch
          %949 = sbr.rel (%p947) target = $region60
        $region59: #{tpu_custom_call.1} parent=35 // pred_region
          %951 = vsyncadd %s943, 0
          %s952 = smul.addr %s25, 2
          %s953 = smul.addr %s952, 8
          %s954 = scalar_lea.hbm %s4, %s953
          %s955 = sshll.u32 %s946, 4
          %s956 = int_to_ptr.vmem [resolvable:$true] %s955
          %s957 = sshll.u32 %s954, 4
          %s958 = int_to_ptr.hbm [resolvable:$true] %s957
          %963 = dma.vmem_to_hbm [thread:$0]  %s956, 256, %s958, %s943, 128, 128, 8
        $region60: #{tpu_custom_call.1} parent=35 // pred_fallthru
          _
      $region36: #{tpu_custom_call.1} parent=5 // pred_fallthru
        _
      %p964 = scmp.le.s32.totalorder 2, %s16
      // Predicated region
      $region61: #{tpu_custom_call.1} parent=5 // pred_check
        %p965 = pneg %p964
      $region62: #{tpu_custom_call.1} parent=5 // pred_check_branch
        %967 = sbr.rel (%p965) target = $region64
      $region63: #{tpu_custom_call.1} parent=5 // pred_region
        %s968 = ssub.s32 %s16, 2
        // Predicated region
        $region65: #{tpu_custom_call.1} parent=63 // pred_check
          %p969 = pneg %p148
        $region66: #{tpu_custom_call.1} parent=63 // pred_check_branch
          %971 = sbr.rel (%p969) target = $region68
        $region67: #{tpu_custom_call.1} parent=63 // pred_region
          %s972 = sand.u32 %s133, 1
          %s973 = scalar_lea.sflag [#allocation7], %s972
          %s974 = sand.u32 %s133, 1
          %s975 = smul.addr %s974, 16
          %s976 = scalar_lea.vmem [#allocation11], %s975
          %978 = dma.done %s973, 256
        $region68: #{tpu_custom_call.1} parent=63 // pred_fallthru
          _
      $region64: #{tpu_custom_call.1} parent=5 // pred_fallthru
        _
    $region6: #{tpu_custom_call.1} parent=1 // loop_footer
      %s20 = sadd.s32 1, %s16
    $region7: #{tpu_custom_call.1} parent=1 // loop_footer_branch
      %15 = sbr.rel target = $region3
    $region8: #{tpu_custom_call.1} parent=1 // loop_exit
      _
    %979 = vsyncpa [#allocation6], 1
    %s980 = scalar_lea.sflag [#allocation6], 1
    %981 = vsyncpa %s980, 1
    %982 = vsyncpa [#allocation9], 1
    %983 = vsyncpa [#allocation7], 1
    %s984 = scalar_lea.sflag [#allocation7], 1
    %985 = vsyncpa %s984, 1

</llo_original>
